<compile_context>
chip_gen: v7x
topology: tpu7x:2x2x1
jax: 0.10.0
libtpu: 0.0.40
codegen_flags: <defaults>
</compile_context>

<pallas_src>
import jax
import jax.numpy as jnp
from jax.experimental import pallas as pl
from jax.experimental.pallas import tpu as pltpu

LANE = 128


def _round_up(n, m=LANE):
    return ((n + m - 1) // m) * m


def lstm_tagger_kernel(idx_ref,        # VMEM (seq, 1) int32 token ids
                       emb_ref,        # VMEM (vocab, Ep) bf16
                       w_ih_t_ref,     # VMEM (Ep, 4Hp) bf16, gate order [i,f,o,g]
                       w_hh_t_ref,     # VMEM (Hp, 4Hp) bf16, gate order [i,f,o,g]
                       bias_ref,       # VMEM (1, 4Hp) f32  (b_ih+b_hh, reordered)
                       w_out_t_ref,    # VMEM (Hp, Tp) bf16
                       b_out_ref,      # VMEM (1, Tp) f32 (padded lanes = -1e30)
                       out_ref,        # VMEM (seq, Tp) f32 log-probs (lane-dense)
                       hs_ref):        # VMEM scratch (seq, Hp) f32 hidden states
    seq = out_ref.shape[0]
    vocab = emb_ref.shape[0]
    Hp = w_hh_t_ref.shape[0]

    # --- 1) Embedding gather as a single one-hot MXU matmul. ---------------
    ids = idx_ref[...]                                           # (seq, 1) i32
    iota = jax.lax.broadcasted_iota(jnp.int32, (seq, vocab), 1)  # (seq, vocab)
    one_hot = (iota == ids).astype(jnp.bfloat16)                 # exact row-pick
    x = jnp.dot(one_hot, emb_ref[...],
                preferred_element_type=jnp.float32)              # (seq, Ep) f32

    # --- 2) Hoisted input projection: one batched MXU matmul + bias. -------
    xg = (jnp.dot(x.astype(jnp.bfloat16), w_ih_t_ref[...],
                  preferred_element_type=jnp.float32)
          + bias_ref[...])                                       # (seq, 4Hp) f32
    # Pre-extract per-step rows off the recurrent critical path.
    xg_rows = [xg[t:t + 1, :] for t in range(seq)]

    # --- 3) Statically unrolled recurrence (h @ w_hh + activations only). --
    h = jnp.zeros((1, Hp), jnp.float32)
    c = jnp.zeros((1, Hp), jnp.float32)
    for t in range(seq):
        # Read w_hh from the ref each step (no ~32-vreg hoisted live value).
        gates = xg_rows[t] + jnp.dot(h.astype(jnp.bfloat16), w_hh_t_ref[...],
                                     preferred_element_type=jnp.float32)
        sig = jax.nn.sigmoid(gates[:, :3 * Hp])     # i,f,o: 3 EUP pushes
        g_g = jnp.tanh(gates[:, 3 * Hp:])           # g:     1 EUP push
        i_g = sig[:, 0 * Hp:1 * Hp]
        f_g = sig[:, 1 * Hp:2 * Hp]
        o_g = sig[:, 2 * Hp:3 * Hp]
        c = f_g * c + i_g * g_g
        h = o_g * jnp.tanh(c)
        hs_ref[t:t + 1, :] = h                      # vst slot; hides under next dot

    # --- 4) Output projection + log_softmax over the (padded) tag lanes. ---
    hs_mat = hs_ref[...]                                         # (seq, Hp) f32
    tag = (jnp.dot(hs_mat.astype(jnp.bfloat16), w_out_t_ref[...],
                   preferred_element_type=jnp.float32)
           + b_out_ref[...])                                     # (seq, Tp) f32
    m = jnp.max(tag, axis=1, keepdims=True)
    shifted = tag - m
    lse = jnp.log(jnp.sum(jnp.exp(shifted), axis=1, keepdims=True))
    out_ref[...] = shifted - lse                                 # lane-dense store


@jax.jit
def lstm_tagger_forward(tokens, emb, w_ih, w_hh, b_ih, b_hh, w_out, b_out):
    """tokens: (seq,) int32.  Weights in PyTorch layout:
       emb (vocab,E), w_ih (4H,E), w_hh (4H,H), b_ih/b_hh (4H,),
       w_out (T,H), b_out (T,).  Returns (seq, T) float32 log-probs."""
    seq = tokens.shape[0]
    vocab, E = emb.shape
    H = w_hh.shape[1]
    T = w_out.shape[0]
    Ep, Hp, Tp = _round_up(E), _round_up(H), _round_up(T)
    f32, bf16 = jnp.float32, jnp.bfloat16

    # ---------------- glue: pad to 128-lane-aligned shapes -----------------
    emb_p = (jnp.zeros((vocab, Ep), f32)
             .at[:, :E].set(jnp.asarray(emb, f32))
             .astype(bf16))                                      # (vocab, Ep)

    # PyTorch gate order along 4H is [i, f, g, o]; reorder to [i, f, o, g].
    GATE_ORDER = (0, 1, 3, 2)

    def _pad_gate_blocked(w_t, K, Kp):
        # w_t: (K, 4H) -> (Kp, 4Hp) bf16, gate blocks reordered to [i,f,o,g],
        # each block zero-padded H -> Hp columns (and K -> Kp rows).
        blocks = []
        for g in GATE_ORDER:
            blk = jnp.zeros((Kp, Hp), f32)
            blk = blk.at[:K, :H].set(w_t[:, g * H:(g + 1) * H])
            blocks.append(blk)
        return jnp.concatenate(blocks, axis=1).astype(bf16)

    w_ih_t_p = _pad_gate_blocked(jnp.asarray(w_ih, f32).T, E, Ep)   # (Ep, 4Hp)
    w_hh_t_p = _pad_gate_blocked(jnp.asarray(w_hh, f32).T, H, Hp)   # (Hp, 4Hp)

    b_gates = (jnp.asarray(b_ih, f32) + jnp.asarray(b_hh, f32)).reshape(4, H)
    b_gates = b_gates[jnp.array(GATE_ORDER)]                         # [i,f,o,g]
    bias_p = (jnp.zeros((4, Hp), f32).at[:, :H].set(b_gates)
              ).reshape(1, 4 * Hp)                                   # (1, 4Hp)

    w_out_t_p = (jnp.zeros((Hp, Tp), f32)
                 .at[:H, :T].set(jnp.asarray(w_out, f32).T)
                 .astype(bf16))                                      # (Hp, Tp)
    b_out_p = (jnp.full((1, Tp), -1e30, f32)
               .at[0, :T].set(jnp.asarray(b_out, f32)))              # (1, Tp)

    idx_col = tokens.astype(jnp.int32).reshape(seq, 1)               # (seq, 1)

    out_pad = pl.pallas_call(
        lstm_tagger_kernel,
        out_shape=jax.ShapeDtypeStruct((seq, Tp), jnp.float32),
        in_specs=[
            pl.BlockSpec(memory_space=pltpu.MemorySpace.VMEM),   # token ids
            pl.BlockSpec(memory_space=pltpu.MemorySpace.VMEM),   # emb table
            pl.BlockSpec(memory_space=pltpu.MemorySpace.VMEM),   # w_ih_t
            pl.BlockSpec(memory_space=pltpu.MemorySpace.VMEM),   # w_hh_t
            pl.BlockSpec(memory_space=pltpu.MemorySpace.VMEM),   # bias
            pl.BlockSpec(memory_space=pltpu.MemorySpace.VMEM),   # w_out_t
            pl.BlockSpec(memory_space=pltpu.MemorySpace.VMEM),   # b_out
        ],
        out_specs=pl.BlockSpec(memory_space=pltpu.MemorySpace.VMEM),
        scratch_shapes=[pltpu.VMEM((seq, Hp), jnp.float32)],     # hidden states
    )(idx_col, emb_p, w_ih_t_p, w_hh_t_p, bias_p, w_out_t_p, b_out_p)

    return out_pad[:, :T]


def _reference(tokens, emb, w_ih, w_hh, b_ih, b_hh, w_out, b_out):
    """Pure-JAX f32 reference of the same forward pass (sanity check)."""
    H = w_hh.shape[1]
    x = emb[tokens]                                      # (seq, E)

    def step(carry, x_t):
        h, c = carry
        g = x_t @ w_ih.T + h @ w_hh.T + b_ih + b_hh
        i = jax.nn.sigmoid(g[0 * H:1 * H])
        f = jax.nn.sigmoid(g[1 * H:2 * H])
        gg = jnp.tanh(g[2 * H:3 * H])
        o = jax.nn.sigmoid(g[3 * H:4 * H])
        c = f * c + i * gg
        h = o * jnp.tanh(c)
        return (h, c), h

    (_, _), hs = jax.lax.scan(step, (jnp.zeros(H), jnp.zeros(H)), x)
    tag_space = hs @ w_out.T + b_out
    return jax.nn.log_softmax(tag_space, axis=1)


if __name__ == "__main__":
    # Module hyper-parameters (small, consistent with the nn.Module's __init__)
    EMBEDDING_DIM = 32
    HIDDEN_DIM = 32
    VOCAB_SIZE = 16
    TARGET_SIZE = 8
    SEQ_LEN = 8

    key = jax.random.PRNGKey(0)
    ks = jax.random.split(key, 8)
    bound = 1.0 / jnp.sqrt(HIDDEN_DIM)

    emb = jax.random.normal(ks[0], (VOCAB_SIZE, EMBEDDING_DIM), jnp.float32)
    w_ih = jax.random.uniform(ks[1], (4 * HIDDEN_DIM, EMBEDDING_DIM),
                              jnp.float32, -bound, bound)
    w_hh = jax.random.uniform(ks[2], (4 * HIDDEN_DIM, HIDDEN_DIM),
                              jnp.float32, -bound, bound)
    b_ih = jax.random.uniform(ks[3], (4 * HIDDEN_DIM,), jnp.float32, -bound, bound)
    b_hh = jax.random.uniform(ks[4], (4 * HIDDEN_DIM,), jnp.float32, -bound, bound)
    w_out = jax.random.uniform(ks[5], (TARGET_SIZE, HIDDEN_DIM),
                               jnp.float32, -bound, bound)
    b_out = jax.random.uniform(ks[6], (TARGET_SIZE,), jnp.float32, -bound, bound)

    tokens = jax.random.randint(ks[7], (SEQ_LEN,), 0, VOCAB_SIZE, jnp.int32)

    tags = lstm_tagger_forward(tokens, emb, w_ih, w_hh, b_ih, b_hh, w_out, b_out)
    tags = jax.block_until_ready(tags)
    assert tags.shape == (SEQ_LEN, TARGET_SIZE)

    ref = _reference(tokens, emb, w_ih, w_hh, b_ih, b_hh, w_out, b_out)
    # Tolerance loosened vs. a pure-f32 reference because the kernel uses
    # bf16 MXU operands (f32 accumulate) as recommended for TPU.
    assert jnp.allclose(tags, ref, atol=2e-2, rtol=2e-2), "mismatch vs reference"
    assert jnp.isfinite(tags).all()

    print("KERNEL_OK")
</pallas_src>

<mosaic_0001>
module attributes {stable_mosaic.version = 11 : i64} {
  func.func @lstm_tagger_kernel(%arg0: memref<8x1xi32, #tpu.memory_space<vmem>>, %arg1: memref<16x128xbf16, #tpu.memory_space<vmem>>, %arg2: memref<128x512xbf16, #tpu.memory_space<vmem>>, %arg3: memref<128x512xbf16, #tpu.memory_space<vmem>>, %arg4: memref<1x512xf32, #tpu.memory_space<vmem>>, %arg5: memref<128x128xbf16, #tpu.memory_space<vmem>>, %arg6: memref<1x128xf32, #tpu.memory_space<vmem>>, %arg7: memref<8x128xf32, #tpu.memory_space<vmem>>, %arg8: memref<8x128xf32, #tpu.memory_space<vmem>>) attributes {dimension_semantics = [], scalar_prefetch = 0 : i64, scratch_operands = 1 : i64, tpu.core_type = #tpu.core_type<tc>} {
    %c0 = arith.constant 0 : index
    %c0_0 = arith.constant 0 : index
    %0 = vector.load %arg0[%c0, %c0_0] : memref<8x1xi32, #tpu.memory_space<vmem>>, vector<8x1xi32>
    %1 = tpu.iota {dimensions = array<i32: 1>} : vector<8x16xi32>
    %2 = vector.broadcast %0 : vector<8x1xi32> to vector<8x16xi32>
    %3 = arith.cmpi eq, %1, %2 : vector<8x16xi32>
    %4 = arith.extui %3 : vector<8x16xi1> to vector<8x16xi32>
    %5 = arith.sitofp %4 : vector<8x16xi32> to vector<8x16xf32>
    %6 = arith.truncf %5 : vector<8x16xf32> to vector<8x16xbf16>
    %c0_1 = arith.constant 0 : index
    %c0_2 = arith.constant 0 : index
    %7 = vector.load %arg1[%c0_1, %c0_2] : memref<16x128xbf16, #tpu.memory_space<vmem>>, vector<16x128xbf16>
    %cst = arith.constant dense<0.000000e+00> : vector<8x128xf32>
    %8 = tpu.matmul %6, %7, %cst {dimension_numbers = #tpu.dot_dimension_numbers<[1], [0], [0], [1], [0, 0, 1, 1], [], []>} : vector<8x16xbf16>, vector<16x128xbf16>, vector<8x128xf32> -> vector<8x128xf32>
    %9 = arith.truncf %8 : vector<8x128xf32> to vector<8x128xbf16>
    %c0_3 = arith.constant 0 : index
    %c0_4 = arith.constant 0 : index
    %10 = vector.load %arg2[%c0_3, %c0_4] : memref<128x512xbf16, #tpu.memory_space<vmem>>, vector<128x512xbf16>
    %cst_5 = arith.constant dense<0.000000e+00> : vector<8x512xf32>
    %11 = tpu.matmul %9, %10, %cst_5 {dimension_numbers = #tpu.dot_dimension_numbers<[1], [0], [0], [1], [0, 0, 1, 1], [], []>} : vector<8x128xbf16>, vector<128x512xbf16>, vector<8x512xf32> -> vector<8x512xf32>
    %c0_6 = arith.constant 0 : index
    %c0_7 = arith.constant 0 : index
    %12 = vector.load %arg4[%c0_6, %c0_7] : memref<1x512xf32, #tpu.memory_space<vmem>>, vector<1x512xf32>
    %13 = vector.broadcast %12 : vector<1x512xf32> to vector<8x512xf32>
    %14 = arith.addf %11, %13 : vector<8x512xf32>
    %15 = vector.extract_strided_slice %14 {offsets = [0, 0], sizes = [1, 512], strides = [1, 1]} : vector<8x512xf32> to vector<1x512xf32>
    %16 = vector.extract_strided_slice %14 {offsets = [1, 0], sizes = [1, 512], strides = [1, 1]} : vector<8x512xf32> to vector<1x512xf32>
    %17 = vector.extract_strided_slice %14 {offsets = [2, 0], sizes = [1, 512], strides = [1, 1]} : vector<8x512xf32> to vector<1x512xf32>
    %18 = vector.extract_strided_slice %14 {offsets = [3, 0], sizes = [1, 512], strides = [1, 1]} : vector<8x512xf32> to vector<1x512xf32>
    %19 = vector.extract_strided_slice %14 {offsets = [4, 0], sizes = [1, 512], strides = [1, 1]} : vector<8x512xf32> to vector<1x512xf32>
    %20 = vector.extract_strided_slice %14 {offsets = [5, 0], sizes = [1, 512], strides = [1, 1]} : vector<8x512xf32> to vector<1x512xf32>
    %21 = vector.extract_strided_slice %14 {offsets = [6, 0], sizes = [1, 512], strides = [1, 1]} : vector<8x512xf32> to vector<1x512xf32>
    %22 = vector.extract_strided_slice %14 {offsets = [7, 0], sizes = [1, 512], strides = [1, 1]} : vector<8x512xf32> to vector<1x512xf32>
    %cst_8 = arith.constant 0.000000e+00 : f32
    %23 = vector.broadcast %cst_8 : f32 to vector<1x128xf32>
    %cst_9 = arith.constant 0.000000e+00 : f32
    %24 = vector.broadcast %cst_9 : f32 to vector<1x128xf32>
    %25 = arith.truncf %23 : vector<1x128xf32> to vector<1x128xbf16>
    %c0_10 = arith.constant 0 : index
    %c0_11 = arith.constant 0 : index
    %26 = vector.load %arg3[%c0_10, %c0_11] : memref<128x512xbf16, #tpu.memory_space<vmem>>, vector<128x512xbf16>
    %cst_12 = arith.constant dense<0.000000e+00> : vector<1x512xf32>
    %27 = tpu.matmul %25, %26, %cst_12 {dimension_numbers = #tpu.dot_dimension_numbers<[1], [0], [0], [1], [0, 0, 1, 1], [], []>} : vector<1x128xbf16>, vector<128x512xbf16>, vector<1x512xf32> -> vector<1x512xf32>
    %28 = arith.addf %15, %27 : vector<1x512xf32>
    %29 = vector.extract_strided_slice %28 {offsets = [0, 0], sizes = [1, 384], strides = [1, 1]} : vector<1x512xf32> to vector<1x384xf32>
    %30 = arith.negf %29 : vector<1x384xf32>
    %31 = math.exp %30 : vector<1x384xf32>
    %cst_13 = arith.constant 1.000000e+00 : f32
    %32 = vector.broadcast %cst_13 : f32 to vector<1x384xf32>
    %33 = arith.addf %32, %31 : vector<1x384xf32>
    %34 = arith.divf %32, %33 : vector<1x384xf32>
    %35 = vector.extract_strided_slice %28 {offsets = [0, 384], sizes = [1, 128], strides = [1, 1]} : vector<1x512xf32> to vector<1x128xf32>
    %36 = math.tanh %35 : vector<1x128xf32>
    %37 = vector.extract_strided_slice %34 {offsets = [0, 0], sizes = [1, 128], strides = [1, 1]} : vector<1x384xf32> to vector<1x128xf32>
    %38 = vector.extract_strided_slice %34 {offsets = [0, 128], sizes = [1, 128], strides = [1, 1]} : vector<1x384xf32> to vector<1x128xf32>
    %39 = vector.extract_strided_slice %34 {offsets = [0, 256], sizes = [1, 128], strides = [1, 1]} : vector<1x384xf32> to vector<1x128xf32>
    %40 = arith.mulf %38, %24 : vector<1x128xf32>
    %41 = arith.mulf %37, %36 : vector<1x128xf32>
    %42 = arith.addf %40, %41 : vector<1x128xf32>
    %43 = math.tanh %42 : vector<1x128xf32>
    %44 = arith.mulf %39, %43 : vector<1x128xf32>
    %c0_14 = arith.constant 0 : index
    %c0_15 = arith.constant 0 : index
    %45 = vector.load %arg8[%c0_14, %c0_15] : memref<8x128xf32, #tpu.memory_space<vmem>>, vector<1x128xf32>
    tpu.vector_store %arg8[%c0_14, %c0_15], %44 {strides = array<i32>} : memref<8x128xf32, #tpu.memory_space<vmem>>, vector<1x128xf32>,
    %46 = arith.truncf %44 : vector<1x128xf32> to vector<1x128xbf16>
    %c0_16 = arith.constant 0 : index
    %c0_17 = arith.constant 0 : index
    %47 = vector.load %arg3[%c0_16, %c0_17] : memref<128x512xbf16, #tpu.memory_space<vmem>>, vector<128x512xbf16>
    %cst_18 = arith.constant dense<0.000000e+00> : vector<1x512xf32>
    %48 = tpu.matmul %46, %47, %cst_18 {dimension_numbers = #tpu.dot_dimension_numbers<[1], [0], [0], [1], [0, 0, 1, 1], [], []>} : vector<1x128xbf16>, vector<128x512xbf16>, vector<1x512xf32> -> vector<1x512xf32>
    %49 = arith.addf %16, %48 : vector<1x512xf32>
    %50 = vector.extract_strided_slice %49 {offsets = [0, 0], sizes = [1, 384], strides = [1, 1]} : vector<1x512xf32> to vector<1x384xf32>
    %51 = arith.negf %50 : vector<1x384xf32>
    %52 = math.exp %51 : vector<1x384xf32>
    %cst_19 = arith.constant 1.000000e+00 : f32
    %53 = vector.broadcast %cst_19 : f32 to vector<1x384xf32>
    %54 = arith.addf %53, %52 : vector<1x384xf32>
    %55 = arith.divf %53, %54 : vector<1x384xf32>
    %56 = vector.extract_strided_slice %49 {offsets = [0, 384], sizes = [1, 128], strides = [1, 1]} : vector<1x512xf32> to vector<1x128xf32>
    %57 = math.tanh %56 : vector<1x128xf32>
    %58 = vector.extract_strided_slice %55 {offsets = [0, 0], sizes = [1, 128], strides = [1, 1]} : vector<1x384xf32> to vector<1x128xf32>
    %59 = vector.extract_strided_slice %55 {offsets = [0, 128], sizes = [1, 128], strides = [1, 1]} : vector<1x384xf32> to vector<1x128xf32>
    %60 = vector.extract_strided_slice %55 {offsets = [0, 256], sizes = [1, 128], strides = [1, 1]} : vector<1x384xf32> to vector<1x128xf32>
    %61 = arith.mulf %59, %42 : vector<1x128xf32>
    %62 = arith.mulf %58, %57 : vector<1x128xf32>
    %63 = arith.addf %61, %62 : vector<1x128xf32>
    %64 = math.tanh %63 : vector<1x128xf32>
    %65 = arith.mulf %60, %64 : vector<1x128xf32>
    %c1 = arith.constant 1 : index
    %c0_20 = arith.constant 0 : index
    %66 = vector.load %arg8[%c1, %c0_20] : memref<8x128xf32, #tpu.memory_space<vmem>>, vector<1x128xf32>
    tpu.vector_store %arg8[%c1, %c0_20], %65 {strides = array<i32>} : memref<8x128xf32, #tpu.memory_space<vmem>>, vector<1x128xf32>,
    %67 = arith.truncf %65 : vector<1x128xf32> to vector<1x128xbf16>
    %c0_21 = arith.constant 0 : index
    %c0_22 = arith.constant 0 : index
    %68 = vector.load %arg3[%c0_21, %c0_22] : memref<128x512xbf16, #tpu.memory_space<vmem>>, vector<128x512xbf16>
    %cst_23 = arith.constant dense<0.000000e+00> : vector<1x512xf32>
    %69 = tpu.matmul %67, %68, %cst_23 {dimension_numbers = #tpu.dot_dimension_numbers<[1], [0], [0], [1], [0, 0, 1, 1], [], []>} : vector<1x128xbf16>, vector<128x512xbf16>, vector<1x512xf32> -> vector<1x512xf32>
    %70 = arith.addf %17, %69 : vector<1x512xf32>
    %71 = vector.extract_strided_slice %70 {offsets = [0, 0], sizes = [1, 384], strides = [1, 1]} : vector<1x512xf32> to vector<1x384xf32>
    %72 = arith.negf %71 : vector<1x384xf32>
    %73 = math.exp %72 : vector<1x384xf32>
    %cst_24 = arith.constant 1.000000e+00 : f32
    %74 = vector.broadcast %cst_24 : f32 to vector<1x384xf32>
    %75 = arith.addf %74, %73 : vector<1x384xf32>
    %76 = arith.divf %74, %75 : vector<1x384xf32>
    %77 = vector.extract_strided_slice %70 {offsets = [0, 384], sizes = [1, 128], strides = [1, 1]} : vector<1x512xf32> to vector<1x128xf32>
    %78 = math.tanh %77 : vector<1x128xf32>
    %79 = vector.extract_strided_slice %76 {offsets = [0, 0], sizes = [1, 128], strides = [1, 1]} : vector<1x384xf32> to vector<1x128xf32>
    %80 = vector.extract_strided_slice %76 {offsets = [0, 128], sizes = [1, 128], strides = [1, 1]} : vector<1x384xf32> to vector<1x128xf32>
    %81 = vector.extract_strided_slice %76 {offsets = [0, 256], sizes = [1, 128], strides = [1, 1]} : vector<1x384xf32> to vector<1x128xf32>
    %82 = arith.mulf %80, %63 : vector<1x128xf32>
    %83 = arith.mulf %79, %78 : vector<1x128xf32>
    %84 = arith.addf %82, %83 : vector<1x128xf32>
    %85 = math.tanh %84 : vector<1x128xf32>
    %86 = arith.mulf %81, %85 : vector<1x128xf32>
    %c2 = arith.constant 2 : index
    %c0_25 = arith.constant 0 : index
    %87 = vector.load %arg8[%c2, %c0_25] : memref<8x128xf32, #tpu.memory_space<vmem>>, vector<1x128xf32>
    tpu.vector_store %arg8[%c2, %c0_25], %86 {strides = array<i32>} : memref<8x128xf32, #tpu.memory_space<vmem>>, vector<1x128xf32>,
    %88 = arith.truncf %86 : vector<1x128xf32> to vector<1x128xbf16>
    %c0_26 = arith.constant 0 : index
    %c0_27 = arith.constant 0 : index
    %89 = vector.load %arg3[%c0_26, %c0_27] : memref<128x512xbf16, #tpu.memory_space<vmem>>, vector<128x512xbf16>
    %cst_28 = arith.constant dense<0.000000e+00> : vector<1x512xf32>
    %90 = tpu.matmul %88, %89, %cst_28 {dimension_numbers = #tpu.dot_dimension_numbers<[1], [0], [0], [1], [0, 0, 1, 1], [], []>} : vector<1x128xbf16>, vector<128x512xbf16>, vector<1x512xf32> -> vector<1x512xf32>
    %91 = arith.addf %18, %90 : vector<1x512xf32>
    %92 = vector.extract_strided_slice %91 {offsets = [0, 0], sizes = [1, 384], strides = [1, 1]} : vector<1x512xf32> to vector<1x384xf32>
    %93 = arith.negf %92 : vector<1x384xf32>
    %94 = math.exp %93 : vector<1x384xf32>
    %cst_29 = arith.constant 1.000000e+00 : f32
    %95 = vector.broadcast %cst_29 : f32 to vector<1x384xf32>
    %96 = arith.addf %95, %94 : vector<1x384xf32>
    %97 = arith.divf %95, %96 : vector<1x384xf32>
    %98 = vector.extract_strided_slice %91 {offsets = [0, 384], sizes = [1, 128], strides = [1, 1]} : vector<1x512xf32> to vector<1x128xf32>
    %99 = math.tanh %98 : vector<1x128xf32>
    %100 = vector.extract_strided_slice %97 {offsets = [0, 0], sizes = [1, 128], strides = [1, 1]} : vector<1x384xf32> to vector<1x128xf32>
    %101 = vector.extract_strided_slice %97 {offsets = [0, 128], sizes = [1, 128], strides = [1, 1]} : vector<1x384xf32> to vector<1x128xf32>
    %102 = vector.extract_strided_slice %97 {offsets = [0, 256], sizes = [1, 128], strides = [1, 1]} : vector<1x384xf32> to vector<1x128xf32>
    %103 = arith.mulf %101, %84 : vector<1x128xf32>
    %104 = arith.mulf %100, %99 : vector<1x128xf32>
    %105 = arith.addf %103, %104 : vector<1x128xf32>
    %106 = math.tanh %105 : vector<1x128xf32>
    %107 = arith.mulf %102, %106 : vector<1x128xf32>
    %c3 = arith.constant 3 : index
    %c0_30 = arith.constant 0 : index
    %108 = vector.load %arg8[%c3, %c0_30] : memref<8x128xf32, #tpu.memory_space<vmem>>, vector<1x128xf32>
    tpu.vector_store %arg8[%c3, %c0_30], %107 {strides = array<i32>} : memref<8x128xf32, #tpu.memory_space<vmem>>, vector<1x128xf32>,
    %109 = arith.truncf %107 : vector<1x128xf32> to vector<1x128xbf16>
    %c0_31 = arith.constant 0 : index
    %c0_32 = arith.constant 0 : index
    %110 = vector.load %arg3[%c0_31, %c0_32] : memref<128x512xbf16, #tpu.memory_space<vmem>>, vector<128x512xbf16>
    %cst_33 = arith.constant dense<0.000000e+00> : vector<1x512xf32>
    %111 = tpu.matmul %109, %110, %cst_33 {dimension_numbers = #tpu.dot_dimension_numbers<[1], [0], [0], [1], [0, 0, 1, 1], [], []>} : vector<1x128xbf16>, vector<128x512xbf16>, vector<1x512xf32> -> vector<1x512xf32>
    %112 = arith.addf %19, %111 : vector<1x512xf32>
    %113 = vector.extract_strided_slice %112 {offsets = [0, 0], sizes = [1, 384], strides = [1, 1]} : vector<1x512xf32> to vector<1x384xf32>
    %114 = arith.negf %113 : vector<1x384xf32>
    %115 = math.exp %114 : vector<1x384xf32>
    %cst_34 = arith.constant 1.000000e+00 : f32
    %116 = vector.broadcast %cst_34 : f32 to vector<1x384xf32>
    %117 = arith.addf %116, %115 : vector<1x384xf32>
    %118 = arith.divf %116, %117 : vector<1x384xf32>
    %119 = vector.extract_strided_slice %112 {offsets = [0, 384], sizes = [1, 128], strides = [1, 1]} : vector<1x512xf32> to vector<1x128xf32>
    %120 = math.tanh %119 : vector<1x128xf32>
    %121 = vector.extract_strided_slice %118 {offsets = [0, 0], sizes = [1, 128], strides = [1, 1]} : vector<1x384xf32> to vector<1x128xf32>
    %122 = vector.extract_strided_slice %118 {offsets = [0, 128], sizes = [1, 128], strides = [1, 1]} : vector<1x384xf32> to vector<1x128xf32>
    %123 = vector.extract_strided_slice %118 {offsets = [0, 256], sizes = [1, 128], strides = [1, 1]} : vector<1x384xf32> to vector<1x128xf32>
    %124 = arith.mulf %122, %105 : vector<1x128xf32>
    %125 = arith.mulf %121, %120 : vector<1x128xf32>
    %126 = arith.addf %124, %125 : vector<1x128xf32>
    %127 = math.tanh %126 : vector<1x128xf32>
    %128 = arith.mulf %123, %127 : vector<1x128xf32>
    %c4 = arith.constant 4 : index
    %c0_35 = arith.constant 0 : index
    %129 = vector.load %arg8[%c4, %c0_35] : memref<8x128xf32, #tpu.memory_space<vmem>>, vector<1x128xf32>
    tpu.vector_store %arg8[%c4, %c0_35], %128 {strides = array<i32>} : memref<8x128xf32, #tpu.memory_space<vmem>>, vector<1x128xf32>,
    %130 = arith.truncf %128 : vector<1x128xf32> to vector<1x128xbf16>
    %c0_36 = arith.constant 0 : index
    %c0_37 = arith.constant 0 : index
    %131 = vector.load %arg3[%c0_36, %c0_37] : memref<128x512xbf16, #tpu.memory_space<vmem>>, vector<128x512xbf16>
    %cst_38 = arith.constant dense<0.000000e+00> : vector<1x512xf32>
    %132 = tpu.matmul %130, %131, %cst_38 {dimension_numbers = #tpu.dot_dimension_numbers<[1], [0], [0], [1], [0, 0, 1, 1], [], []>} : vector<1x128xbf16>, vector<128x512xbf16>, vector<1x512xf32> -> vector<1x512xf32>
    %133 = arith.addf %20, %132 : vector<1x512xf32>
    %134 = vector.extract_strided_slice %133 {offsets = [0, 0], sizes = [1, 384], strides = [1, 1]} : vector<1x512xf32> to vector<1x384xf32>
    %135 = arith.negf %134 : vector<1x384xf32>
    %136 = math.exp %135 : vector<1x384xf32>
    %cst_39 = arith.constant 1.000000e+00 : f32
    %137 = vector.broadcast %cst_39 : f32 to vector<1x384xf32>
    %138 = arith.addf %137, %136 : vector<1x384xf32>
    %139 = arith.divf %137, %138 : vector<1x384xf32>
    %140 = vector.extract_strided_slice %133 {offsets = [0, 384], sizes = [1, 128], strides = [1, 1]} : vector<1x512xf32> to vector<1x128xf32>
    %141 = math.tanh %140 : vector<1x128xf32>
    %142 = vector.extract_strided_slice %139 {offsets = [0, 0], sizes = [1, 128], strides = [1, 1]} : vector<1x384xf32> to vector<1x128xf32>
    %143 = vector.extract_strided_slice %139 {offsets = [0, 128], sizes = [1, 128], strides = [1, 1]} : vector<1x384xf32> to vector<1x128xf32>
    %144 = vector.extract_strided_slice %139 {offsets = [0, 256], sizes = [1, 128], strides = [1, 1]} : vector<1x384xf32> to vector<1x128xf32>
    %145 = arith.mulf %143, %126 : vector<1x128xf32>
    %146 = arith.mulf %142, %141 : vector<1x128xf32>
    %147 = arith.addf %145, %146 : vector<1x128xf32>
    %148 = math.tanh %147 : vector<1x128xf32>
    %149 = arith.mulf %144, %148 : vector<1x128xf32>
    %c5 = arith.constant 5 : index
    %c0_40 = arith.constant 0 : index
    %150 = vector.load %arg8[%c5, %c0_40] : memref<8x128xf32, #tpu.memory_space<vmem>>, vector<1x128xf32>
    tpu.vector_store %arg8[%c5, %c0_40], %149 {strides = array<i32>} : memref<8x128xf32, #tpu.memory_space<vmem>>, vector<1x128xf32>,
    %151 = arith.truncf %149 : vector<1x128xf32> to vector<1x128xbf16>
    %c0_41 = arith.constant 0 : index
    %c0_42 = arith.constant 0 : index
    %152 = vector.load %arg3[%c0_41, %c0_42] : memref<128x512xbf16, #tpu.memory_space<vmem>>, vector<128x512xbf16>
    %cst_43 = arith.constant dense<0.000000e+00> : vector<1x512xf32>
    %153 = tpu.matmul %151, %152, %cst_43 {dimension_numbers = #tpu.dot_dimension_numbers<[1], [0], [0], [1], [0, 0, 1, 1], [], []>} : vector<1x128xbf16>, vector<128x512xbf16>, vector<1x512xf32> -> vector<1x512xf32>
    %154 = arith.addf %21, %153 : vector<1x512xf32>
    %155 = vector.extract_strided_slice %154 {offsets = [0, 0], sizes = [1, 384], strides = [1, 1]} : vector<1x512xf32> to vector<1x384xf32>
    %156 = arith.negf %155 : vector<1x384xf32>
    %157 = math.exp %156 : vector<1x384xf32>
    %cst_44 = arith.constant 1.000000e+00 : f32
    %158 = vector.broadcast %cst_44 : f32 to vector<1x384xf32>
    %159 = arith.addf %158, %157 : vector<1x384xf32>
    %160 = arith.divf %158, %159 : vector<1x384xf32>
    %161 = vector.extract_strided_slice %154 {offsets = [0, 384], sizes = [1, 128], strides = [1, 1]} : vector<1x512xf32> to vector<1x128xf32>
    %162 = math.tanh %161 : vector<1x128xf32>
    %163 = vector.extract_strided_slice %160 {offsets = [0, 0], sizes = [1, 128], strides = [1, 1]} : vector<1x384xf32> to vector<1x128xf32>
    %164 = vector.extract_strided_slice %160 {offsets = [0, 128], sizes = [1, 128], strides = [1, 1]} : vector<1x384xf32> to vector<1x128xf32>
    %165 = vector.extract_strided_slice %160 {offsets = [0, 256], sizes = [1, 128], strides = [1, 1]} : vector<1x384xf32> to vector<1x128xf32>
    %166 = arith.mulf %164, %147 : vector<1x128xf32>
    %167 = arith.mulf %163, %162 : vector<1x128xf32>
    %168 = arith.addf %166, %167 : vector<1x128xf32>
    %169 = math.tanh %168 : vector<1x128xf32>
    %170 = arith.mulf %165, %169 : vector<1x128xf32>
    %c6 = arith.constant 6 : index
    %c0_45 = arith.constant 0 : index
    %171 = vector.load %arg8[%c6, %c0_45] : memref<8x128xf32, #tpu.memory_space<vmem>>, vector<1x128xf32>
    tpu.vector_store %arg8[%c6, %c0_45], %170 {strides = array<i32>} : memref<8x128xf32, #tpu.memory_space<vmem>>, vector<1x128xf32>,
    %172 = arith.truncf %170 : vector<1x128xf32> to vector<1x128xbf16>
    %c0_46 = arith.constant 0 : index
    %c0_47 = arith.constant 0 : index
    %173 = vector.load %arg3[%c0_46, %c0_47] : memref<128x512xbf16, #tpu.memory_space<vmem>>, vector<128x512xbf16>
    %cst_48 = arith.constant dense<0.000000e+00> : vector<1x512xf32>
    %174 = tpu.matmul %172, %173, %cst_48 {dimension_numbers = #tpu.dot_dimension_numbers<[1], [0], [0], [1], [0, 0, 1, 1], [], []>} : vector<1x128xbf16>, vector<128x512xbf16>, vector<1x512xf32> -> vector<1x512xf32>
    %175 = arith.addf %22, %174 : vector<1x512xf32>
    %176 = vector.extract_strided_slice %175 {offsets = [0, 0], sizes = [1, 384], strides = [1, 1]} : vector<1x512xf32> to vector<1x384xf32>
    %177 = arith.negf %176 : vector<1x384xf32>
    %178 = math.exp %177 : vector<1x384xf32>
    %cst_49 = arith.constant 1.000000e+00 : f32
    %179 = vector.broadcast %cst_49 : f32 to vector<1x384xf32>
    %180 = arith.addf %179, %178 : vector<1x384xf32>
    %181 = arith.divf %179, %180 : vector<1x384xf32>
    %182 = vector.extract_strided_slice %175 {offsets = [0, 384], sizes = [1, 128], strides = [1, 1]} : vector<1x512xf32> to vector<1x128xf32>
    %183 = math.tanh %182 : vector<1x128xf32>
    %184 = vector.extract_strided_slice %181 {offsets = [0, 0], sizes = [1, 128], strides = [1, 1]} : vector<1x384xf32> to vector<1x128xf32>
    %185 = vector.extract_strided_slice %181 {offsets = [0, 128], sizes = [1, 128], strides = [1, 1]} : vector<1x384xf32> to vector<1x128xf32>
    %186 = vector.extract_strided_slice %181 {offsets = [0, 256], sizes = [1, 128], strides = [1, 1]} : vector<1x384xf32> to vector<1x128xf32>
    %187 = arith.mulf %185, %168 : vector<1x128xf32>
    %188 = arith.mulf %184, %183 : vector<1x128xf32>
    %189 = arith.addf %187, %188 : vector<1x128xf32>
    %190 = math.tanh %189 : vector<1x128xf32>
    %191 = arith.mulf %186, %190 : vector<1x128xf32>
    %c7 = arith.constant 7 : index
    %c0_50 = arith.constant 0 : index
    %192 = vector.load %arg8[%c7, %c0_50] : memref<8x128xf32, #tpu.memory_space<vmem>>, vector<1x128xf32>
    tpu.vector_store %arg8[%c7, %c0_50], %191 {strides = array<i32>} : memref<8x128xf32, #tpu.memory_space<vmem>>, vector<1x128xf32>,
    %c0_51 = arith.constant 0 : index
    %c0_52 = arith.constant 0 : index
    %193 = vector.load %arg8[%c0_51, %c0_52] : memref<8x128xf32, #tpu.memory_space<vmem>>, vector<8x128xf32>
    %194 = arith.truncf %193 : vector<8x128xf32> to vector<8x128xbf16>
    %c0_53 = arith.constant 0 : index
    %c0_54 = arith.constant 0 : index
    %195 = vector.load %arg5[%c0_53, %c0_54] : memref<128x128xbf16, #tpu.memory_space<vmem>>, vector<128x128xbf16>
    %cst_55 = arith.constant dense<0.000000e+00> : vector<8x128xf32>
    %196 = tpu.matmul %194, %195, %cst_55 {dimension_numbers = #tpu.dot_dimension_numbers<[1], [0], [0], [1], [0, 0, 1, 1], [], []>} : vector<8x128xbf16>, vector<128x128xbf16>, vector<8x128xf32> -> vector<8x128xf32>
    %c0_56 = arith.constant 0 : index
    %c0_57 = arith.constant 0 : index
    %197 = vector.load %arg6[%c0_56, %c0_57] : memref<1x128xf32, #tpu.memory_space<vmem>>, vector<1x128xf32>
    %198 = vector.broadcast %197 : vector<1x128xf32> to vector<8x128xf32>
    %199 = arith.addf %196, %198 : vector<8x128xf32>
    %cst_58 = arith.constant dense<0xFF800000> : vector<8xf32>
    %200 = vector.multi_reduction <maximumf>, %199, %cst_58 [1] : vector<8x128xf32> to vector<8xf32>
    %201 = vector.shape_cast %200 : vector<8xf32> to vector<8x1xf32>
    %202 = vector.broadcast %201 : vector<8x1xf32> to vector<8x128xf32>
    %203 = arith.subf %199, %202 : vector<8x128xf32>
    %204 = math.exp %203 : vector<8x128xf32>
    %cst_59 = arith.constant dense<0.000000e+00> : vector<8xf32>
    %205 = vector.multi_reduction <add>, %204, %cst_59 [1] : vector<8x128xf32> to vector<8xf32>
    %206 = vector.shape_cast %205 : vector<8xf32> to vector<8x1xf32>
    %207 = math.log %206 : vector<8x1xf32>
    %208 = vector.broadcast %207 : vector<8x1xf32> to vector<8x128xf32>
    %209 = arith.subf %203, %208 : vector<8x128xf32>
    %c0_60 = arith.constant 0 : index
    %c0_61 = arith.constant 0 : index
    %210 = vector.load %arg7[%c0_60, %c0_61] : memref<8x128xf32, #tpu.memory_space<vmem>>, vector<8x128xf32>
    tpu.vector_store %arg7[%c0_60, %c0_61], %209 {strides = array<i32>} : memref<8x128xf32, #tpu.memory_space<vmem>>, vector<8x128xf32>,
    return
  }
}

</mosaic_0001>

<llo_original>
// kernel: lstm_tagger_forward.1
$region0: #{lstm_tagger_forward.1}
  #allocation0 [shape = 'u32[]', space=smem, size = 0x4, offset = 0x4, fixed_abs, tag = 'smem constant byte address 0x4 - core index']
  #allocation1 [shape = 'u32[144,128]{1,0:T(1,128)}', space=vmem, size = 0x12000, scoped, tag = 'internal scratch']
  #allocation2 [shape = 'f32[8,128]{1,0:T(8,128)}', space=vmem, size = 0x1000, scoped, tag = 'scratch operand']
  %s0 = inlined_call_operand.vmem [shape: s32[8,1], index: 0, kind: input, shape index: {}]
  %s1 = inlined_call_operand.vmem [shape: bf16[16,128], index: 1, kind: input, shape index: {}]
  %s2 = inlined_call_operand.vmem [shape: bf16[128,512], index: 2, kind: input, shape index: {}]
  %s3 = inlined_call_operand.vmem [shape: bf16[128,512], index: 3, kind: input, shape index: {}]
  %s4 = inlined_call_operand.vmem [shape: f32[1,512], index: 4, kind: input, shape index: {}]
  %s5 = inlined_call_operand.vmem [shape: bf16[128,128], index: 5, kind: input, shape index: {}]
  %s6 = inlined_call_operand.vmem [shape: f32[1,128], index: 6, kind: input, shape index: {}]
  %s7 = inlined_call_operand.hbm [shape: f32[8,128], index: 7, kind: output, shape index: {}]
  %s8 = sld [smem:[#allocation0]]
  $region38: #{lstm_tagger_forward.1} parent=0
    _
  %s10 = ssub.s32 1, %s8
  %s11 = scalar_select 0, %s10, %s8
  $region1: #{lstm_tagger_forward.1} parent=0
    #allocation3 [shape = 'u8[4096]{0}', space=vmem, size = 0x1000, scoped, tag = 'output window, operand 0, single buffered']
    #allocation4 [shape = 's32[1]{0}', space=sflag, size = 0x4, scoped, tag = 'scoped memory for lstm_tagger_forward.1']
    %12 = vsyncpa [#allocation4], 0
    // Predicated region
    $region2: #{lstm_tagger_forward.1} parent=1 // pred_check
      _
    $region3: #{lstm_tagger_forward.1} parent=1 // pred_check_branch
      %14 = sbr.rel (0) target = $region5
    $region4: #{lstm_tagger_forward.1} parent=1 // pred_region
      _
    $region5: #{lstm_tagger_forward.1} parent=1 // pred_fallthru
      _
    // Predicated region
    $region6: #{lstm_tagger_forward.1} parent=1 // pred_check
      _
    $region7: #{lstm_tagger_forward.1} parent=1 // pred_check_branch
      %16 = sbr.rel (0) target = $region9
    $region8: #{lstm_tagger_forward.1} parent=1 // pred_region
      _
    $region9: #{lstm_tagger_forward.1} parent=1 // pred_fallthru
      _
    // Predicated region
    $region10: #{lstm_tagger_forward.1} parent=1 // pred_check
      _
    $region11: #{lstm_tagger_forward.1} parent=1 // pred_check_branch
      %18 = sbr.rel (0) target = $region13
    $region12: #{lstm_tagger_forward.1} parent=1 // pred_region
      _
    $region13: #{lstm_tagger_forward.1} parent=1 // pred_fallthru
      _
    // Predicated region
    $region14: #{lstm_tagger_forward.1} parent=1 // pred_check
      _
    $region15: #{lstm_tagger_forward.1} parent=1 // pred_check_branch
      %20 = sbr.rel (0) target = $region17
    $region16: #{lstm_tagger_forward.1} parent=1 // pred_region
      _
    $region17: #{lstm_tagger_forward.1} parent=1 // pred_fallthru
      _
    // Predicated region
    $region18: #{lstm_tagger_forward.1} parent=1 // pred_check
      _
    $region19: #{lstm_tagger_forward.1} parent=1 // pred_check_branch
      %22 = sbr.rel (0) target = $region21
    $region20: #{lstm_tagger_forward.1} parent=1 // pred_region
      _
    $region21: #{lstm_tagger_forward.1} parent=1 // pred_fallthru
      _
    // Predicated region
    $region22: #{lstm_tagger_forward.1} parent=1 // pred_check
      _
    $region23: #{lstm_tagger_forward.1} parent=1 // pred_check_branch
      %24 = sbr.rel (0) target = $region25
    $region24: #{lstm_tagger_forward.1} parent=1 // pred_region
      _
    $region25: #{lstm_tagger_forward.1} parent=1 // pred_fallthru
      _
    // Predicated region
    $region26: #{lstm_tagger_forward.1} parent=1 // pred_check
      _
    $region27: #{lstm_tagger_forward.1} parent=1 // pred_check_branch
      %26 = sbr.rel (0) target = $region29
    $region28: #{lstm_tagger_forward.1} parent=1 // pred_region
      _
    $region29: #{lstm_tagger_forward.1} parent=1 // pred_fallthru
      _
    %v28 = vld [vmem:[%s0] sm:$0xff]
    %v29 = vlaneseq
    %v30 = vand.u32 %v29, 127
    %31 = vset.pattern.permute.xlu0 0
    %32 = vperm.xlu0 %31, %v28
    %v33 = vpop.permute.xlu0 %32
    %vm34 = vcmp.eq.s32.totalorder %v30, %v33
    %v35 = vsel %vm34, 1, 0
    %v36 = vcvt.s32.f32 %v35
    %v37 = vpack.c.bf16 %v36, %v36
    %v38 = vld [vmem:[%s1] sm:$0xf]
    %v39 = vld [vmem:[%s1 + $0x4] sm:$0xf]
    %v42 = vunpack.c.l.b16 %v38
    %v43 = vunpack.c.l.b16 %v39
    %v44 = vpack.c.b16 %v43, %v42
    %vm46 = vcmask 130048
    %v48 = vsel %vm46, %v37, 0
    %50 = vmatprep.subr.bf16.mxu0 0
    %51 = vmatpush1.bf16.msra.mxu0 %v44
    %52 = vmatprep.subr.bf16.mxu0 0
    %53 = vmatpush1.bf16.msra.mxu0 0
    %54 = vmatprep.subr.bf16.mxu0 0
    %55 = vmatpush1.bf16.msra.mxu0 0
    %56 = vmatprep.subr.bf16.mxu0 0
    %57 = vmatpush1.bf16.msra.mxu0 0
    %58 = vmatprep.subr.bf16.mxu0 0
    %59 = vmatpush1.bf16.msra.mxu0 0
    %60 = vmatprep.subr.bf16.mxu0 0
    %61 = vmatpush1.bf16.msra.mxu0 0
    %62 = vmatprep.subr.bf16.mxu0 0
    %63 = vmatpush1.bf16.msra.mxu0 0
    %64 = vmatprep.subr.bf16.mxu0 0
    %65 = vmatpush1.bf16.msra.mxu0 0
    %66 = vmatprep.subr.bf16.mxu0 0
    %67 = vmatpush1.bf16.msra.mxu0 0
    %68 = vmatprep.subr.bf16.mxu0 0
    %69 = vmatpush1.bf16.msra.mxu0 0
    %70 = vmatprep.subr.bf16.mxu0 0
    %71 = vmatpush1.bf16.msra.mxu0 0
    %72 = vmatprep.subr.bf16.mxu0 0
    %73 = vmatpush1.bf16.msra.mxu0 0
    %74 = vmatprep.subr.bf16.mxu0 0
    %75 = vmatpush1.bf16.msra.mxu0 0
    %76 = vmatprep.subr.bf16.mxu0 0
    %77 = vmatpush1.bf16.msra.mxu0 0
    %78 = vmatprep.subr.bf16.mxu0 0
    %79 = vmatpush1.bf16.msra.mxu0 0
    %80 = vmatprep.subr.bf16.mxu0 0
    %81 = vmatpush1.bf16.msra.mxu0 0
    %82 = vmatprep.mubr.bf16.mxu0 0
    %83 = vmatmul.mubr.bf16.gmra.mrb[0].mxu0 %v48
    %v84 = vpop.f32.mrb[0].mxu0
    %v85 = vadd.f32 0.0, %v84
    %v86 = vpop.f32.mrb[0].mxu0
    %v87 = vpop.f32.mrb[0].mxu0
    %v88 = vpop.f32.mrb[0].mxu0
    %89 = vdwg.mxu0
    %v90 = vpack.c.bf16 %v85, %v85
    %v91 = vld [vmem:[%s2] sm:$0xff]
    %v92 = vld [vmem:[%s2 + $0x8] sm:$0xff]
    %v93 = vld [vmem:[%s2 + $0x10] sm:$0xff]
    %v94 = vld [vmem:[%s2 + $0x18] sm:$0xff]
    %v95 = vld [vmem:[%s2 + $0x20] sm:$0xff]
    %v96 = vld [vmem:[%s2 + $0x28] sm:$0xff]
    %v97 = vld [vmem:[%s2 + $0x30] sm:$0xff]
    %v98 = vld [vmem:[%s2 + $0x38] sm:$0xff]
    %v99 = vld [vmem:[%s2 + $0x40] sm:$0xff]
    %v100 = vld [vmem:[%s2 + $0x48] sm:$0xff]
    %v101 = vld [vmem:[%s2 + $0x50] sm:$0xff]
    %v102 = vld [vmem:[%s2 + $0x58] sm:$0xff]
    %v103 = vld [vmem:[%s2 + $0x60] sm:$0xff]
    %v104 = vld [vmem:[%s2 + $0x68] sm:$0xff]
    %v105 = vld [vmem:[%s2 + $0x70] sm:$0xff]
    %v106 = vld [vmem:[%s2 + $0x78] sm:$0xff]
    %v107 = vld [vmem:[%s2 + $0x80] sm:$0xff]
    %v108 = vld [vmem:[%s2 + $0x88] sm:$0xff]
    %v109 = vld [vmem:[%s2 + $0x90] sm:$0xff]
    %v110 = vld [vmem:[%s2 + $0x98] sm:$0xff]
    %v111 = vld [vmem:[%s2 + $0xa0] sm:$0xff]
    %v112 = vld [vmem:[%s2 + $0xa8] sm:$0xff]
    %v113 = vld [vmem:[%s2 + $0xb0] sm:$0xff]
    %v114 = vld [vmem:[%s2 + $0xb8] sm:$0xff]
    %v115 = vld [vmem:[%s2 + $0xc0] sm:$0xff]
    %v116 = vld [vmem:[%s2 + $0xc8] sm:$0xff]
    %v117 = vld [vmem:[%s2 + $0xd0] sm:$0xff]
    %v118 = vld [vmem:[%s2 + $0xd8] sm:$0xff]
    %v119 = vld [vmem:[%s2 + $0xe0] sm:$0xff]
    %v120 = vld [vmem:[%s2 + $0xe8] sm:$0xff]
    %v121 = vld [vmem:[%s2 + $0xf0] sm:$0xff]
    %v122 = vld [vmem:[%s2 + $0xf8] sm:$0xff]
    %v123 = vld [vmem:[%s4] sm:$0xf]
    %v125 = vlaneseq
    %v126 = vshrl.u32 %v125, 7
    %v127 = vsub.s32 0, %v126
    %v128 = vrot.slane %v123, %v127
    %v129 = vlaneseq
    %v130 = vshrl.u32 %v129, 7
    %v131 = vsub.s32 1, %v130
    %v132 = vrot.slane %v123, %v131
    %v133 = vlaneseq
    %v134 = vshrl.u32 %v133, 7
    %v135 = vsub.s32 2, %v134
    %v136 = vrot.slane %v123, %v135
    %v137 = vlaneseq
    %v138 = vshrl.u32 %v137, 7
    %v139 = vsub.s32 3, %v138
    %v140 = vrot.slane %v123, %v139
    %v177 = vunpack.c.l.b16 %v91
    %v178 = vunpack.c.h.b16 %v91
    %v179 = vunpack.c.l.b16 %v92
    %v180 = vunpack.c.h.b16 %v92
    %v181 = vunpack.c.l.b16 %v93
    %v182 = vunpack.c.h.b16 %v93
    %v183 = vunpack.c.l.b16 %v94
    %v184 = vunpack.c.h.b16 %v94
    %v185 = vunpack.c.l.b16 %v95
    %v186 = vunpack.c.h.b16 %v95
    %v187 = vunpack.c.l.b16 %v96
    %v188 = vunpack.c.h.b16 %v96
    %v189 = vunpack.c.l.b16 %v97
    %v190 = vunpack.c.h.b16 %v97
    %v191 = vunpack.c.l.b16 %v98
    %v192 = vunpack.c.h.b16 %v98
    %v193 = vunpack.c.l.b16 %v99
    %v194 = vunpack.c.h.b16 %v99
    %v195 = vunpack.c.l.b16 %v100
    %v196 = vunpack.c.h.b16 %v100
    %v197 = vunpack.c.l.b16 %v101
    %v198 = vunpack.c.h.b16 %v101
    %v199 = vunpack.c.l.b16 %v102
    %v200 = vunpack.c.h.b16 %v102
    %v201 = vunpack.c.l.b16 %v103
    %v202 = vunpack.c.h.b16 %v103
    %v203 = vunpack.c.l.b16 %v104
    %v204 = vunpack.c.h.b16 %v104
    %v205 = vunpack.c.l.b16 %v105
    %v206 = vunpack.c.h.b16 %v105
    %v207 = vunpack.c.l.b16 %v106
    %v208 = vunpack.c.h.b16 %v106
    %v209 = vunpack.c.l.b16 %v107
    %v210 = vunpack.c.h.b16 %v107
    %v211 = vunpack.c.l.b16 %v108
    %v212 = vunpack.c.h.b16 %v108
    %v213 = vunpack.c.l.b16 %v109
    %v214 = vunpack.c.h.b16 %v109
    %v215 = vunpack.c.l.b16 %v110
    %v216 = vunpack.c.h.b16 %v110
    %v217 = vunpack.c.l.b16 %v111
    %v218 = vunpack.c.h.b16 %v111
    %v219 = vunpack.c.l.b16 %v112
    %v220 = vunpack.c.h.b16 %v112
    %v221 = vunpack.c.l.b16 %v113
    %v222 = vunpack.c.h.b16 %v113
    %v223 = vunpack.c.l.b16 %v114
    %v224 = vunpack.c.h.b16 %v114
    %v225 = vunpack.c.l.b16 %v115
    %v226 = vunpack.c.h.b16 %v115
    %v227 = vunpack.c.l.b16 %v116
    %v228 = vunpack.c.h.b16 %v116
    %v229 = vunpack.c.l.b16 %v117
    %v230 = vunpack.c.h.b16 %v117
    %v231 = vunpack.c.l.b16 %v118
    %v232 = vunpack.c.h.b16 %v118
    %v233 = vunpack.c.l.b16 %v119
    %v234 = vunpack.c.h.b16 %v119
    %v235 = vunpack.c.l.b16 %v120
    %v236 = vunpack.c.h.b16 %v120
    %v237 = vunpack.c.l.b16 %v121
    %v238 = vunpack.c.h.b16 %v121
    %v239 = vunpack.c.l.b16 %v122
    %v240 = vunpack.c.h.b16 %v122
    %v241 = vpack.c.b16 %v181, %v177
    %v242 = vpack.c.b16 %v182, %v178
    %v243 = vpack.c.b16 %v183, %v179
    %v244 = vpack.c.b16 %v184, %v180
    %v245 = vpack.c.b16 %v189, %v185
    %v246 = vpack.c.b16 %v190, %v186
    %v247 = vpack.c.b16 %v191, %v187
    %v248 = vpack.c.b16 %v192, %v188
    %v249 = vpack.c.b16 %v197, %v193
    %v250 = vpack.c.b16 %v198, %v194
    %v251 = vpack.c.b16 %v199, %v195
    %v252 = vpack.c.b16 %v200, %v196
    %v253 = vpack.c.b16 %v205, %v201
    %v254 = vpack.c.b16 %v206, %v202
    %v255 = vpack.c.b16 %v207, %v203
    %v256 = vpack.c.b16 %v208, %v204
    %v257 = vpack.c.b16 %v213, %v209
    %v258 = vpack.c.b16 %v214, %v210
    %v259 = vpack.c.b16 %v215, %v211
    %v260 = vpack.c.b16 %v216, %v212
    %v261 = vpack.c.b16 %v221, %v217
    %v262 = vpack.c.b16 %v222, %v218
    %v263 = vpack.c.b16 %v223, %v219
    %v264 = vpack.c.b16 %v224, %v220
    %v265 = vpack.c.b16 %v229, %v225
    %v266 = vpack.c.b16 %v230, %v226
    %v267 = vpack.c.b16 %v231, %v227
    %v268 = vpack.c.b16 %v232, %v228
    %v269 = vpack.c.b16 %v237, %v233
    %v270 = vpack.c.b16 %v238, %v234
    %v271 = vpack.c.b16 %v239, %v235
    %v272 = vpack.c.b16 %v240, %v236
    %305 = vmatprep.subr.bf16.mxu0 %v242
    %306 = vmatpush1.bf16.msra.mxu0 %v241
    %307 = vmatprep.subr.bf16.mxu0 %v246
    %308 = vmatpush1.bf16.msra.mxu0 %v245
    %309 = vmatprep.subr.bf16.mxu0 %v250
    %310 = vmatpush1.bf16.msra.mxu0 %v249
    %311 = vmatprep.subr.bf16.mxu0 %v254
    %312 = vmatpush1.bf16.msra.mxu0 %v253
    %313 = vmatprep.subr.bf16.mxu0 %v258
    %314 = vmatpush1.bf16.msra.mxu0 %v257
    %315 = vmatprep.subr.bf16.mxu0 %v262
    %316 = vmatpush1.bf16.msra.mxu0 %v261
    %317 = vmatprep.subr.bf16.mxu0 %v266
    %318 = vmatpush1.bf16.msra.mxu0 %v265
    %319 = vmatprep.subr.bf16.mxu0 %v270
    %320 = vmatpush1.bf16.msra.mxu0 %v269
    %321 = vmatprep.subr.bf16.mxu0 0
    %322 = vmatpush1.bf16.msra.mxu0 0
    %323 = vmatprep.subr.bf16.mxu0 0
    %324 = vmatpush1.bf16.msra.mxu0 0
    %325 = vmatprep.subr.bf16.mxu0 0
    %326 = vmatpush1.bf16.msra.mxu0 0
    %327 = vmatprep.subr.bf16.mxu0 0
    %328 = vmatpush1.bf16.msra.mxu0 0
    %329 = vmatprep.subr.bf16.mxu0 0
    %330 = vmatpush1.bf16.msra.mxu0 0
    %331 = vmatprep.subr.bf16.mxu0 0
    %332 = vmatpush1.bf16.msra.mxu0 0
    %333 = vmatprep.subr.bf16.mxu0 0
    %334 = vmatpush1.bf16.msra.mxu0 0
    %335 = vmatprep.subr.bf16.mxu0 0
    %336 = vmatpush1.bf16.msra.mxu0 0
    %337 = vmatprep.mubr.bf16.mxu0 0
    %338 = vmatmul.mubr.bf16.gmra.mrb[0].mxu0 %v90
    %v339 = vpop.f32.mrb[0].mxu0
    %v340 = vadd.f32 %v128, %v339
    %v341 = vpop.f32.mrb[0].mxu0
    %v342 = vadd.f32 %v132, %v341
    %v343 = vpop.f32.mrb[0].mxu0
    %v344 = vpop.f32.mrb[0].mxu0
    %345 = vdwg.mxu0
    %346 = vmatprep.subr.bf16.mxu0 %v244
    %347 = vmatpush1.bf16.msra.mxu0 %v243
    %348 = vmatprep.subr.bf16.mxu0 %v248
    %349 = vmatpush1.bf16.msra.mxu0 %v247
    %350 = vmatprep.subr.bf16.mxu0 %v252
    %351 = vmatpush1.bf16.msra.mxu0 %v251
    %352 = vmatprep.subr.bf16.mxu0 %v256
    %353 = vmatpush1.bf16.msra.mxu0 %v255
    %354 = vmatprep.subr.bf16.mxu0 %v260
    %355 = vmatpush1.bf16.msra.mxu0 %v259
    %356 = vmatprep.subr.bf16.mxu0 %v264
    %357 = vmatpush1.bf16.msra.mxu0 %v263
    %358 = vmatprep.subr.bf16.mxu0 %v268
    %359 = vmatpush1.bf16.msra.mxu0 %v267
    %360 = vmatprep.subr.bf16.mxu0 %v272
    %361 = vmatpush1.bf16.msra.mxu0 %v271
    %362 = vmatprep.subr.bf16.mxu0 0
    %363 = vmatpush1.bf16.msra.mxu0 0
    %364 = vmatprep.subr.bf16.mxu0 0
    %365 = vmatpush1.bf16.msra.mxu0 0
    %366 = vmatprep.subr.bf16.mxu0 0
    %367 = vmatpush1.bf16.msra.mxu0 0
    %368 = vmatprep.subr.bf16.mxu0 0
    %369 = vmatpush1.bf16.msra.mxu0 0
    %370 = vmatprep.subr.bf16.mxu0 0
    %371 = vmatpush1.bf16.msra.mxu0 0
    %372 = vmatprep.subr.bf16.mxu0 0
    %373 = vmatpush1.bf16.msra.mxu0 0
    %374 = vmatprep.subr.bf16.mxu0 0
    %375 = vmatpush1.bf16.msra.mxu0 0
    %376 = vmatprep.subr.bf16.mxu0 0
    %377 = vmatpush1.bf16.msra.mxu0 0
    %378 = vmatprep.mubr.bf16.mxu0 0
    %379 = vmatmul.mubr.bf16.gmra.mrb[0].mxu0 %v90
    %v380 = vpop.f32.mrb[0].mxu0
    %v381 = vadd.f32 %v136, %v380
    %v382 = vpop.f32.mrb[0].mxu0
    %v383 = vadd.f32 %v140, %v382
    %v384 = vpop.f32.mrb[0].mxu0
    %v385 = vpop.f32.mrb[0].mxu0
    %386 = vdwg.mxu0
    %v387 = vld [vmem:[%s3] sm:$0xff]
    %v388 = vld [vmem:[%s3 + $0x8] sm:$0xff]
    %v389 = vld [vmem:[%s3 + $0x10] sm:$0xff]
    %v390 = vld [vmem:[%s3 + $0x18] sm:$0xff]
    %v391 = vld [vmem:[%s3 + $0x20] sm:$0xff]
    %v392 = vld [vmem:[%s3 + $0x28] sm:$0xff]
    %v393 = vld [vmem:[%s3 + $0x30] sm:$0xff]
    %v394 = vld [vmem:[%s3 + $0x38] sm:$0xff]
    %v395 = vld [vmem:[%s3 + $0x40] sm:$0xff]
    %v396 = vld [vmem:[%s3 + $0x48] sm:$0xff]
    %v397 = vld [vmem:[%s3 + $0x50] sm:$0xff]
    %v398 = vld [vmem:[%s3 + $0x58] sm:$0xff]
    %v399 = vld [vmem:[%s3 + $0x60] sm:$0xff]
    %v400 = vld [vmem:[%s3 + $0x68] sm:$0xff]
    %v401 = vld [vmem:[%s3 + $0x70] sm:$0xff]
    %v402 = vld [vmem:[%s3 + $0x78] sm:$0xff]
    %v403 = vld [vmem:[%s3 + $0x80] sm:$0xff]
    %v404 = vld [vmem:[%s3 + $0x88] sm:$0xff]
    %v405 = vld [vmem:[%s3 + $0x90] sm:$0xff]
    %v406 = vld [vmem:[%s3 + $0x98] sm:$0xff]
    %v407 = vld [vmem:[%s3 + $0xa0] sm:$0xff]
    %v408 = vld [vmem:[%s3 + $0xa8] sm:$0xff]
    %v409 = vld [vmem:[%s3 + $0xb0] sm:$0xff]
    %v410 = vld [vmem:[%s3 + $0xb8] sm:$0xff]
    %v411 = vld [vmem:[%s3 + $0xc0] sm:$0xff]
    %v412 = vld [vmem:[%s3 + $0xc8] sm:$0xff]
    %v413 = vld [vmem:[%s3 + $0xd0] sm:$0xff]
    %v414 = vld [vmem:[%s3 + $0xd8] sm:$0xff]
    %v415 = vld [vmem:[%s3 + $0xe0] sm:$0xff]
    %v416 = vld [vmem:[%s3 + $0xe8] sm:$0xff]
    %v417 = vld [vmem:[%s3 + $0xf0] sm:$0xff]
    %v418 = vld [vmem:[%s3 + $0xf8] sm:$0xff]
    %v451 = vunpack.c.l.b16 %v387
    %v452 = vunpack.c.h.b16 %v387
    %v453 = vunpack.c.l.b16 %v388
    %v454 = vunpack.c.h.b16 %v388
    %v455 = vunpack.c.l.b16 %v389
    %v456 = vunpack.c.h.b16 %v389
    %v457 = vunpack.c.l.b16 %v390
    %v458 = vunpack.c.h.b16 %v390
    %v459 = vunpack.c.l.b16 %v391
    %v460 = vunpack.c.h.b16 %v391
    %v461 = vunpack.c.l.b16 %v392
    %v462 = vunpack.c.h.b16 %v392
    %v463 = vunpack.c.l.b16 %v393
    %v464 = vunpack.c.h.b16 %v393
    %v465 = vunpack.c.l.b16 %v394
    %v466 = vunpack.c.h.b16 %v394
    %v467 = vunpack.c.l.b16 %v395
    %v468 = vunpack.c.h.b16 %v395
    %v469 = vunpack.c.l.b16 %v396
    %v470 = vunpack.c.h.b16 %v396
    %v471 = vunpack.c.l.b16 %v397
    %v472 = vunpack.c.h.b16 %v397
    %v473 = vunpack.c.l.b16 %v398
    %v474 = vunpack.c.h.b16 %v398
    %v475 = vunpack.c.l.b16 %v399
    %v476 = vunpack.c.h.b16 %v399
    %v477 = vunpack.c.l.b16 %v400
    %v478 = vunpack.c.h.b16 %v400
    %v479 = vunpack.c.l.b16 %v401
    %v480 = vunpack.c.h.b16 %v401
    %v481 = vunpack.c.l.b16 %v402
    %v482 = vunpack.c.h.b16 %v402
    %v483 = vunpack.c.l.b16 %v403
    %v484 = vunpack.c.h.b16 %v403
    %v485 = vunpack.c.l.b16 %v404
    %v486 = vunpack.c.h.b16 %v404
    %v487 = vunpack.c.l.b16 %v405
    %v488 = vunpack.c.h.b16 %v405
    %v489 = vunpack.c.l.b16 %v406
    %v490 = vunpack.c.h.b16 %v406
    %v491 = vunpack.c.l.b16 %v407
    %v492 = vunpack.c.h.b16 %v407
    %v493 = vunpack.c.l.b16 %v408
    %v494 = vunpack.c.h.b16 %v408
    %v495 = vunpack.c.l.b16 %v409
    %v496 = vunpack.c.h.b16 %v409
    %v497 = vunpack.c.l.b16 %v410
    %v498 = vunpack.c.h.b16 %v410
    %v499 = vunpack.c.l.b16 %v411
    %v500 = vunpack.c.h.b16 %v411
    %v501 = vunpack.c.l.b16 %v412
    %v502 = vunpack.c.h.b16 %v412
    %v503 = vunpack.c.l.b16 %v413
    %v504 = vunpack.c.h.b16 %v413
    %v505 = vunpack.c.l.b16 %v414
    %v506 = vunpack.c.h.b16 %v414
    %v507 = vunpack.c.l.b16 %v415
    %v508 = vunpack.c.h.b16 %v415
    %v509 = vunpack.c.l.b16 %v416
    %v510 = vunpack.c.h.b16 %v416
    %v511 = vunpack.c.l.b16 %v417
    %v512 = vunpack.c.h.b16 %v417
    %v513 = vunpack.c.l.b16 %v418
    %v514 = vunpack.c.h.b16 %v418
    %v515 = vpack.c.b16 %v455, %v451
    %v516 = vpack.c.b16 %v456, %v452
    %v517 = vpack.c.b16 %v457, %v453
    %v518 = vpack.c.b16 %v458, %v454
    %v519 = vpack.c.b16 %v463, %v459
    %v520 = vpack.c.b16 %v464, %v460
    %v521 = vpack.c.b16 %v465, %v461
    %v522 = vpack.c.b16 %v466, %v462
    %v523 = vpack.c.b16 %v471, %v467
    %v524 = vpack.c.b16 %v472, %v468
    %v525 = vpack.c.b16 %v473, %v469
    %v526 = vpack.c.b16 %v474, %v470
    %v527 = vpack.c.b16 %v479, %v475
    %v528 = vpack.c.b16 %v480, %v476
    %v529 = vpack.c.b16 %v481, %v477
    %v530 = vpack.c.b16 %v482, %v478
    %v531 = vpack.c.b16 %v487, %v483
    %v532 = vpack.c.b16 %v488, %v484
    %v533 = vpack.c.b16 %v489, %v485
    %v534 = vpack.c.b16 %v490, %v486
    %v535 = vpack.c.b16 %v495, %v491
    %v536 = vpack.c.b16 %v496, %v492
    %v537 = vpack.c.b16 %v497, %v493
    %v538 = vpack.c.b16 %v498, %v494
    %v539 = vpack.c.b16 %v503, %v499
    %v540 = vpack.c.b16 %v504, %v500
    %v541 = vpack.c.b16 %v505, %v501
    %v542 = vpack.c.b16 %v506, %v502
    %v543 = vpack.c.b16 %v511, %v507
    %v544 = vpack.c.b16 %v512, %v508
    %v545 = vpack.c.b16 %v513, %v509
    %v546 = vpack.c.b16 %v514, %v510
    %579 = vmatprep.subr.bf16.mxu0 %v516
    %580 = vmatpush1.bf16.msra.mxu0 %v515
    %581 = vmatprep.subr.bf16.mxu0 %v520
    %582 = vmatpush1.bf16.msra.mxu0 %v519
    %583 = vmatprep.subr.bf16.mxu0 %v524
    %584 = vmatpush1.bf16.msra.mxu0 %v523
    %585 = vmatprep.subr.bf16.mxu0 %v528
    %586 = vmatpush1.bf16.msra.mxu0 %v527
    %587 = vmatprep.subr.bf16.mxu0 %v532
    %588 = vmatpush1.bf16.msra.mxu0 %v531
    %589 = vmatprep.subr.bf16.mxu0 %v536
    %590 = vmatpush1.bf16.msra.mxu0 %v535
    %591 = vmatprep.subr.bf16.mxu0 %v540
    %592 = vmatpush1.bf16.msra.mxu0 %v539
    %593 = vmatprep.subr.bf16.mxu0 %v544
    %594 = vmatpush1.bf16.msra.mxu0 %v543
    %595 = vmatprep.subr.bf16.mxu0 0
    %596 = vmatpush1.bf16.msra.mxu0 0
    %597 = vmatprep.subr.bf16.mxu0 0
    %598 = vmatpush1.bf16.msra.mxu0 0
    %599 = vmatprep.subr.bf16.mxu0 0
    %600 = vmatpush1.bf16.msra.mxu0 0
    %601 = vmatprep.subr.bf16.mxu0 0
    %602 = vmatpush1.bf16.msra.mxu0 0
    %603 = vmatprep.subr.bf16.mxu0 0
    %604 = vmatpush1.bf16.msra.mxu0 0
    %605 = vmatprep.subr.bf16.mxu0 0
    %606 = vmatpush1.bf16.msra.mxu0 0
    %607 = vmatprep.subr.bf16.mxu0 0
    %608 = vmatpush1.bf16.msra.mxu0 0
    %609 = vmatprep.subr.bf16.mxu0 0
    %610 = vmatpush1.bf16.msra.mxu0 0
    %611 = vmatprep.mubr.bf16.mxu0 0
    %612 = vmatmul.mubr.bf16.gmra.mrb[0].mxu0 0
    %v613 = vpop.f32.mrb[0].mxu0
    %v614 = vadd.f32 0.0, %v613
    %v615 = vpop.f32.mrb[0].mxu0
    %v616 = vadd.f32 0.0, %v615
    %v617 = vpop.f32.mrb[0].mxu0
    %v618 = vpop.f32.mrb[0].mxu0
    %619 = vdwg.mxu0
    %620 = vmatprep.subr.bf16.mxu0 %v518
    %621 = vmatpush1.bf16.msra.mxu0 %v517
    %622 = vmatprep.subr.bf16.mxu0 %v522
    %623 = vmatpush1.bf16.msra.mxu0 %v521
    %624 = vmatprep.subr.bf16.mxu0 %v526
    %625 = vmatpush1.bf16.msra.mxu0 %v525
    %626 = vmatprep.subr.bf16.mxu0 %v530
    %627 = vmatpush1.bf16.msra.mxu0 %v529
    %628 = vmatprep.subr.bf16.mxu0 %v534
    %629 = vmatpush1.bf16.msra.mxu0 %v533
    %630 = vmatprep.subr.bf16.mxu0 %v538
    %631 = vmatpush1.bf16.msra.mxu0 %v537
    %632 = vmatprep.subr.bf16.mxu0 %v542
    %633 = vmatpush1.bf16.msra.mxu0 %v541
    %634 = vmatprep.subr.bf16.mxu0 %v546
    %635 = vmatpush1.bf16.msra.mxu0 %v545
    %636 = vmatprep.subr.bf16.mxu0 0
    %637 = vmatpush1.bf16.msra.mxu0 0
    %638 = vmatprep.subr.bf16.mxu0 0
    %639 = vmatpush1.bf16.msra.mxu0 0
    %640 = vmatprep.subr.bf16.mxu0 0
    %641 = vmatpush1.bf16.msra.mxu0 0
    %642 = vmatprep.subr.bf16.mxu0 0
    %643 = vmatpush1.bf16.msra.mxu0 0
    %644 = vmatprep.subr.bf16.mxu0 0
    %645 = vmatpush1.bf16.msra.mxu0 0
    %646 = vmatprep.subr.bf16.mxu0 0
    %647 = vmatpush1.bf16.msra.mxu0 0
    %648 = vmatprep.subr.bf16.mxu0 0
    %649 = vmatpush1.bf16.msra.mxu0 0
    %650 = vmatprep.subr.bf16.mxu0 0
    %651 = vmatpush1.bf16.msra.mxu0 0
    %652 = vmatprep.mubr.bf16.mxu0 0
    %653 = vmatmul.mubr.bf16.gmra.mrb[0].mxu0 0
    %v654 = vpop.f32.mrb[0].mxu0
    %v655 = vadd.f32 0.0, %v654
    %v656 = vpop.f32.mrb[0].mxu0
    %v657 = vadd.f32 0.0, %v656
    %v658 = vpop.f32.mrb[0].mxu0
    %v659 = vpop.f32.mrb[0].mxu0
    %660 = vdwg.mxu0
    %v661 = vadd.f32 %v340, %v614
    %v662 = vadd.f32 %v342, %v616
    %v663 = vadd.f32 %v381, %v655
    %v664 = vadd.f32 %v383, %v657
    %v665 = vxor.u32 %v661, 2147483648
    %v666 = vxor.u32 %v662, 2147483648
    %v667 = vxor.u32 %v663, 2147483648
    %v668 = vmul.f32 %v665, 1.442695
    %v669 = vpow.pop %v668
    %v670 = vmul.f32 %v666, 1.442695
    %v671 = vpow.pop %v670
    %v672 = vmul.f32 %v667, 1.442695
    %v673 = vpow.pop %v672
    %v674 = vadd.f32 %v669, 1.0
    %v675 = vadd.f32 %v671, 1.0
    %v676 = vadd.f32 %v673, 1.0
    %v677 = vrcp.pop %v674
    %v678 = vmul.f32 1.0, %v677
    %v679 = vrcp.pop %v675
    %v680 = vmul.f32 1.0, %v679
    %v681 = vrcp.pop %v676
    %v682 = vmul.f32 1.0, %v681
    %v683 = vtanh.pop %v664
    %v684 = vmul.f32 %v680, 0.0
    %v685 = vmul.f32 %v678, %v683
    %v686 = vadd.f32 %v684, %v685
    %v687 = vtanh.pop %v686
    %v688 = vmul.f32 %v682, %v687
    %689 = vst [vmem:[#allocation2] sm:$0x1] %v688
    %v690 = vpack.c.bf16 %v688, %v688
    %v691 = vld [vmem:[%s3] sm:$0xff]
    %v692 = vld [vmem:[%s3 + $0x8] sm:$0xff]
    %v693 = vld [vmem:[%s3 + $0x10] sm:$0xff]
    %v694 = vld [vmem:[%s3 + $0x18] sm:$0xff]
    %v695 = vld [vmem:[%s3 + $0x20] sm:$0xff]
    %v696 = vld [vmem:[%s3 + $0x28] sm:$0xff]
    %v697 = vld [vmem:[%s3 + $0x30] sm:$0xff]
    %v698 = vld [vmem:[%s3 + $0x38] sm:$0xff]
    %v699 = vld [vmem:[%s3 + $0x40] sm:$0xff]
    %v700 = vld [vmem:[%s3 + $0x48] sm:$0xff]
    %v701 = vld [vmem:[%s3 + $0x50] sm:$0xff]
    %v702 = vld [vmem:[%s3 + $0x58] sm:$0xff]
    %v703 = vld [vmem:[%s3 + $0x60] sm:$0xff]
    %v704 = vld [vmem:[%s3 + $0x68] sm:$0xff]
    %v705 = vld [vmem:[%s3 + $0x70] sm:$0xff]
    %v706 = vld [vmem:[%s3 + $0x78] sm:$0xff]
    %v707 = vld [vmem:[%s3 + $0x80] sm:$0xff]
    %v708 = vld [vmem:[%s3 + $0x88] sm:$0xff]
    %v709 = vld [vmem:[%s3 + $0x90] sm:$0xff]
    %v710 = vld [vmem:[%s3 + $0x98] sm:$0xff]
    %v711 = vld [vmem:[%s3 + $0xa0] sm:$0xff]
    %v712 = vld [vmem:[%s3 + $0xa8] sm:$0xff]
    %v713 = vld [vmem:[%s3 + $0xb0] sm:$0xff]
    %v714 = vld [vmem:[%s3 + $0xb8] sm:$0xff]
    %v715 = vld [vmem:[%s3 + $0xc0] sm:$0xff]
    %v716 = vld [vmem:[%s3 + $0xc8] sm:$0xff]
    %v717 = vld [vmem:[%s3 + $0xd0] sm:$0xff]
    %v718 = vld [vmem:[%s3 + $0xd8] sm:$0xff]
    %v719 = vld [vmem:[%s3 + $0xe0] sm:$0xff]
    %v720 = vld [vmem:[%s3 + $0xe8] sm:$0xff]
    %v721 = vld [vmem:[%s3 + $0xf0] sm:$0xff]
    %v722 = vld [vmem:[%s3 + $0xf8] sm:$0xff]
    %v755 = vunpack.c.l.b16 %v691
    %v756 = vunpack.c.h.b16 %v691
    %v757 = vunpack.c.l.b16 %v692
    %v758 = vunpack.c.h.b16 %v692
    %v759 = vunpack.c.l.b16 %v693
    %v760 = vunpack.c.h.b16 %v693
    %v761 = vunpack.c.l.b16 %v694
    %v762 = vunpack.c.h.b16 %v694
    %v763 = vunpack.c.l.b16 %v695
    %v764 = vunpack.c.h.b16 %v695
    %v765 = vunpack.c.l.b16 %v696
    %v766 = vunpack.c.h.b16 %v696
    %v767 = vunpack.c.l.b16 %v697
    %v768 = vunpack.c.h.b16 %v697
    %v769 = vunpack.c.l.b16 %v698
    %v770 = vunpack.c.h.b16 %v698
    %v771 = vunpack.c.l.b16 %v699
    %v772 = vunpack.c.h.b16 %v699
    %v773 = vunpack.c.l.b16 %v700
    %v774 = vunpack.c.h.b16 %v700
    %v775 = vunpack.c.l.b16 %v701
    %v776 = vunpack.c.h.b16 %v701
    %v777 = vunpack.c.l.b16 %v702
    %v778 = vunpack.c.h.b16 %v702
    %v779 = vunpack.c.l.b16 %v703
    %v780 = vunpack.c.h.b16 %v703
    %v781 = vunpack.c.l.b16 %v704
    %v782 = vunpack.c.h.b16 %v704
    %v783 = vunpack.c.l.b16 %v705
    %v784 = vunpack.c.h.b16 %v705
    %v785 = vunpack.c.l.b16 %v706
    %v786 = vunpack.c.h.b16 %v706
    %v787 = vunpack.c.l.b16 %v707
    %v788 = vunpack.c.h.b16 %v707
    %v789 = vunpack.c.l.b16 %v708
    %v790 = vunpack.c.h.b16 %v708
    %v791 = vunpack.c.l.b16 %v709
    %v792 = vunpack.c.h.b16 %v709
    %v793 = vunpack.c.l.b16 %v710
    %v794 = vunpack.c.h.b16 %v710
    %v795 = vunpack.c.l.b16 %v711
    %v796 = vunpack.c.h.b16 %v711
    %v797 = vunpack.c.l.b16 %v712
    %v798 = vunpack.c.h.b16 %v712
    %v799 = vunpack.c.l.b16 %v713
    %v800 = vunpack.c.h.b16 %v713
    %v801 = vunpack.c.l.b16 %v714
    %v802 = vunpack.c.h.b16 %v714
    %v803 = vunpack.c.l.b16 %v715
    %v804 = vunpack.c.h.b16 %v715
    %v805 = vunpack.c.l.b16 %v716
    %v806 = vunpack.c.h.b16 %v716
    %v807 = vunpack.c.l.b16 %v717
    %v808 = vunpack.c.h.b16 %v717
    %v809 = vunpack.c.l.b16 %v718
    %v810 = vunpack.c.h.b16 %v718
    %v811 = vunpack.c.l.b16 %v719
    %v812 = vunpack.c.h.b16 %v719
    %v813 = vunpack.c.l.b16 %v720
    %v814 = vunpack.c.h.b16 %v720
    %v815 = vunpack.c.l.b16 %v721
    %v816 = vunpack.c.h.b16 %v721
    %v817 = vunpack.c.l.b16 %v722
    %v818 = vunpack.c.h.b16 %v722
    %v819 = vpack.c.b16 %v759, %v755
    %v820 = vpack.c.b16 %v760, %v756
    %v821 = vpack.c.b16 %v761, %v757
    %v822 = vpack.c.b16 %v762, %v758
    %v823 = vpack.c.b16 %v767, %v763
    %v824 = vpack.c.b16 %v768, %v764
    %v825 = vpack.c.b16 %v769, %v765
    %v826 = vpack.c.b16 %v770, %v766
    %v827 = vpack.c.b16 %v775, %v771
    %v828 = vpack.c.b16 %v776, %v772
    %v829 = vpack.c.b16 %v777, %v773
    %v830 = vpack.c.b16 %v778, %v774
    %v831 = vpack.c.b16 %v783, %v779
    %v832 = vpack.c.b16 %v784, %v780
    %v833 = vpack.c.b16 %v785, %v781
    %v834 = vpack.c.b16 %v786, %v782
    %v835 = vpack.c.b16 %v791, %v787
    %v836 = vpack.c.b16 %v792, %v788
    %v837 = vpack.c.b16 %v793, %v789
    %v838 = vpack.c.b16 %v794, %v790
    %v839 = vpack.c.b16 %v799, %v795
    %v840 = vpack.c.b16 %v800, %v796
    %v841 = vpack.c.b16 %v801, %v797
    %v842 = vpack.c.b16 %v802, %v798
    %v843 = vpack.c.b16 %v807, %v803
    %v844 = vpack.c.b16 %v808, %v804
    %v845 = vpack.c.b16 %v809, %v805
    %v846 = vpack.c.b16 %v810, %v806
    %v847 = vpack.c.b16 %v815, %v811
    %v848 = vpack.c.b16 %v816, %v812
    %v849 = vpack.c.b16 %v817, %v813
    %v850 = vpack.c.b16 %v818, %v814
    %883 = vmatprep.subr.bf16.mxu0 %v820
    %884 = vmatpush1.bf16.msra.mxu0 %v819
    %885 = vmatprep.subr.bf16.mxu0 %v824
    %886 = vmatpush1.bf16.msra.mxu0 %v823
    %887 = vmatprep.subr.bf16.mxu0 %v828
    %888 = vmatpush1.bf16.msra.mxu0 %v827
    %889 = vmatprep.subr.bf16.mxu0 %v832
    %890 = vmatpush1.bf16.msra.mxu0 %v831
    %891 = vmatprep.subr.bf16.mxu0 %v836
    %892 = vmatpush1.bf16.msra.mxu0 %v835
    %893 = vmatprep.subr.bf16.mxu0 %v840
    %894 = vmatpush1.bf16.msra.mxu0 %v839
    %895 = vmatprep.subr.bf16.mxu0 %v844
    %896 = vmatpush1.bf16.msra.mxu0 %v843
    %897 = vmatprep.subr.bf16.mxu0 %v848
    %898 = vmatpush1.bf16.msra.mxu0 %v847
    %899 = vmatprep.subr.bf16.mxu0 0
    %900 = vmatpush1.bf16.msra.mxu0 0
    %901 = vmatprep.subr.bf16.mxu0 0
    %902 = vmatpush1.bf16.msra.mxu0 0
    %903 = vmatprep.subr.bf16.mxu0 0
    %904 = vmatpush1.bf16.msra.mxu0 0
    %905 = vmatprep.subr.bf16.mxu0 0
    %906 = vmatpush1.bf16.msra.mxu0 0
    %907 = vmatprep.subr.bf16.mxu0 0
    %908 = vmatpush1.bf16.msra.mxu0 0
    %909 = vmatprep.subr.bf16.mxu0 0
    %910 = vmatpush1.bf16.msra.mxu0 0
    %911 = vmatprep.subr.bf16.mxu0 0
    %912 = vmatpush1.bf16.msra.mxu0 0
    %913 = vmatprep.subr.bf16.mxu0 0
    %914 = vmatpush1.bf16.msra.mxu0 0
    %915 = vmatprep.mubr.bf16.mxu0 0
    %916 = vmatmul.mubr.bf16.gmra.mrb[0].mxu0 %v690
    %v917 = vpop.f32.mrb[0].mxu0
    %v918 = vadd.f32 0.0, %v917
    %v919 = vpop.f32.mrb[0].mxu0
    %v920 = vadd.f32 0.0, %v919
    %v921 = vpop.f32.mrb[0].mxu0
    %v922 = vpop.f32.mrb[0].mxu0
    %923 = vdwg.mxu0
    %924 = vmatprep.subr.bf16.mxu0 %v822
    %925 = vmatpush1.bf16.msra.mxu0 %v821
    %926 = vmatprep.subr.bf16.mxu0 %v826
    %927 = vmatpush1.bf16.msra.mxu0 %v825
    %928 = vmatprep.subr.bf16.mxu0 %v830
    %929 = vmatpush1.bf16.msra.mxu0 %v829
    %930 = vmatprep.subr.bf16.mxu0 %v834
    %931 = vmatpush1.bf16.msra.mxu0 %v833
    %932 = vmatprep.subr.bf16.mxu0 %v838
    %933 = vmatpush1.bf16.msra.mxu0 %v837
    %934 = vmatprep.subr.bf16.mxu0 %v842
    %935 = vmatpush1.bf16.msra.mxu0 %v841
    %936 = vmatprep.subr.bf16.mxu0 %v846
    %937 = vmatpush1.bf16.msra.mxu0 %v845
    %938 = vmatprep.subr.bf16.mxu0 %v850
    %939 = vmatpush1.bf16.msra.mxu0 %v849
    %940 = vmatprep.subr.bf16.mxu0 0
    %941 = vmatpush1.bf16.msra.mxu0 0
    %942 = vmatprep.subr.bf16.mxu0 0
    %943 = vmatpush1.bf16.msra.mxu0 0
    %944 = vmatprep.subr.bf16.mxu0 0
    %945 = vmatpush1.bf16.msra.mxu0 0
    %946 = vmatprep.subr.bf16.mxu0 0
    %947 = vmatpush1.bf16.msra.mxu0 0
    %948 = vmatprep.subr.bf16.mxu0 0
    %949 = vmatpush1.bf16.msra.mxu0 0
    %950 = vmatprep.subr.bf16.mxu0 0
    %951 = vmatpush1.bf16.msra.mxu0 0
    %952 = vmatprep.subr.bf16.mxu0 0
    %953 = vmatpush1.bf16.msra.mxu0 0
    %954 = vmatprep.subr.bf16.mxu0 0
    %955 = vmatpush1.bf16.msra.mxu0 0
    %956 = vmatprep.mubr.bf16.mxu0 0
    %957 = vmatmul.mubr.bf16.gmra.mrb[0].mxu0 %v690
    %v958 = vpop.f32.mrb[0].mxu0
    %v959 = vadd.f32 0.0, %v958
    %v960 = vpop.f32.mrb[0].mxu0
    %v961 = vadd.f32 0.0, %v960
    %v962 = vpop.f32.mrb[0].mxu0
    %v963 = vpop.f32.mrb[0].mxu0
    %964 = vdwg.mxu0
    %v969 = vrot.slane %v918, 7
    %v970 = vrot.slane %v920, 7
    %v971 = vrot.slane %v959, 7
    %v972 = vrot.slane %v961, 7
    %v977 = vadd.f32 %v340, %v969
    %v978 = vadd.f32 %v342, %v970
    %v979 = vadd.f32 %v381, %v971
    %v980 = vadd.f32 %v383, %v972
    %v981 = vxor.u32 %v977, 2147483648
    %v982 = vxor.u32 %v978, 2147483648
    %v983 = vxor.u32 %v979, 2147483648
    %v984 = vmul.f32 %v981, 1.442695
    %v985 = vpow.pop %v984
    %v986 = vmul.f32 %v982, 1.442695
    %v987 = vpow.pop %v986
    %v988 = vmul.f32 %v983, 1.442695
    %v989 = vpow.pop %v988
    %v990 = vadd.f32 %v985, 1.0
    %v991 = vadd.f32 %v987, 1.0
    %v992 = vadd.f32 %v989, 1.0
    %v993 = vrcp.pop %v990
    %v994 = vmul.f32 1.0, %v993
    %v995 = vrcp.pop %v991
    %v996 = vmul.f32 1.0, %v995
    %v997 = vrcp.pop %v992
    %v998 = vmul.f32 1.0, %v997
    %v999 = vtanh.pop %v980
    %v1001 = vrot.slane %v686, 7
    %v1003 = vmul.f32 %v996, %v1001
    %v1004 = vmul.f32 %v994, %v999
    %v1005 = vadd.f32 %v1003, %v1004
    %v1006 = vtanh.pop %v1005
    %v1007 = vmul.f32 %v998, %v1006
    %1008 = vst [vmem:[#allocation2] sm:$0x2] %v1007
    %v1009 = vpack.c.bf16 %v1007, %v1007
    %v1010 = vld [vmem:[%s3] sm:$0xff]
    %v1011 = vld [vmem:[%s3 + $0x8] sm:$0xff]
    %v1012 = vld [vmem:[%s3 + $0x10] sm:$0xff]
    %v1013 = vld [vmem:[%s3 + $0x18] sm:$0xff]
    %v1014 = vld [vmem:[%s3 + $0x20] sm:$0xff]
    %v1015 = vld [vmem:[%s3 + $0x28] sm:$0xff]
    %v1016 = vld [vmem:[%s3 + $0x30] sm:$0xff]
    %v1017 = vld [vmem:[%s3 + $0x38] sm:$0xff]
    %v1018 = vld [vmem:[%s3 + $0x40] sm:$0xff]
    %v1019 = vld [vmem:[%s3 + $0x48] sm:$0xff]
    %v1020 = vld [vmem:[%s3 + $0x50] sm:$0xff]
    %v1021 = vld [vmem:[%s3 + $0x58] sm:$0xff]
    %v1022 = vld [vmem:[%s3 + $0x60] sm:$0xff]
    %v1023 = vld [vmem:[%s3 + $0x68] sm:$0xff]
    %v1024 = vld [vmem:[%s3 + $0x70] sm:$0xff]
    %v1025 = vld [vmem:[%s3 + $0x78] sm:$0xff]
    %v1026 = vld [vmem:[%s3 + $0x80] sm:$0xff]
    %v1027 = vld [vmem:[%s3 + $0x88] sm:$0xff]
    %v1028 = vld [vmem:[%s3 + $0x90] sm:$0xff]
    %v1029 = vld [vmem:[%s3 + $0x98] sm:$0xff]
    %v1030 = vld [vmem:[%s3 + $0xa0] sm:$0xff]
    %v1031 = vld [vmem:[%s3 + $0xa8] sm:$0xff]
    %v1032 = vld [vmem:[%s3 + $0xb0] sm:$0xff]
    %v1033 = vld [vmem:[%s3 + $0xb8] sm:$0xff]
    %v1034 = vld [vmem:[%s3 + $0xc0] sm:$0xff]
    %v1035 = vld [vmem:[%s3 + $0xc8] sm:$0xff]
    %v1036 = vld [vmem:[%s3 + $0xd0] sm:$0xff]
    %v1037 = vld [vmem:[%s3 + $0xd8] sm:$0xff]
    %v1038 = vld [vmem:[%s3 + $0xe0] sm:$0xff]
    %v1039 = vld [vmem:[%s3 + $0xe8] sm:$0xff]
    %v1040 = vld [vmem:[%s3 + $0xf0] sm:$0xff]
    %v1041 = vld [vmem:[%s3 + $0xf8] sm:$0xff]
    %v1043 = vshrl.u32 %v1009, 16
    %v1078 = vunpack.c.l.b16 %v1010
    %v1079 = vunpack.c.h.b16 %v1010
    %v1080 = vunpack.c.l.b16 %v1011
    %v1081 = vunpack.c.h.b16 %v1011
    %v1082 = vunpack.c.l.b16 %v1012
    %v1083 = vunpack.c.h.b16 %v1012
    %v1084 = vunpack.c.l.b16 %v1013
    %v1085 = vunpack.c.h.b16 %v1013
    %v1086 = vunpack.c.l.b16 %v1014
    %v1087 = vunpack.c.h.b16 %v1014
    %v1088 = vunpack.c.l.b16 %v1015
    %v1089 = vunpack.c.h.b16 %v1015
    %v1090 = vunpack.c.l.b16 %v1016
    %v1091 = vunpack.c.h.b16 %v1016
    %v1092 = vunpack.c.l.b16 %v1017
    %v1093 = vunpack.c.h.b16 %v1017
    %v1094 = vunpack.c.l.b16 %v1018
    %v1095 = vunpack.c.h.b16 %v1018
    %v1096 = vunpack.c.l.b16 %v1019
    %v1097 = vunpack.c.h.b16 %v1019
    %v1098 = vunpack.c.l.b16 %v1020
    %v1099 = vunpack.c.h.b16 %v1020
    %v1100 = vunpack.c.l.b16 %v1021
    %v1101 = vunpack.c.h.b16 %v1021
    %v1102 = vunpack.c.l.b16 %v1022
    %v1103 = vunpack.c.h.b16 %v1022
    %v1104 = vunpack.c.l.b16 %v1023
    %v1105 = vunpack.c.h.b16 %v1023
    %v1106 = vunpack.c.l.b16 %v1024
    %v1107 = vunpack.c.h.b16 %v1024
    %v1108 = vunpack.c.l.b16 %v1025
    %v1109 = vunpack.c.h.b16 %v1025
    %v1110 = vunpack.c.l.b16 %v1026
    %v1111 = vunpack.c.h.b16 %v1026
    %v1112 = vunpack.c.l.b16 %v1027
    %v1113 = vunpack.c.h.b16 %v1027
    %v1114 = vunpack.c.l.b16 %v1028
    %v1115 = vunpack.c.h.b16 %v1028
    %v1116 = vunpack.c.l.b16 %v1029
    %v1117 = vunpack.c.h.b16 %v1029
    %v1118 = vunpack.c.l.b16 %v1030
    %v1119 = vunpack.c.h.b16 %v1030
    %v1120 = vunpack.c.l.b16 %v1031
    %v1121 = vunpack.c.h.b16 %v1031
    %v1122 = vunpack.c.l.b16 %v1032
    %v1123 = vunpack.c.h.b16 %v1032
    %v1124 = vunpack.c.l.b16 %v1033
    %v1125 = vunpack.c.h.b16 %v1033
    %v1126 = vunpack.c.l.b16 %v1034
    %v1127 = vunpack.c.h.b16 %v1034
    %v1128 = vunpack.c.l.b16 %v1035
    %v1129 = vunpack.c.h.b16 %v1035
    %v1130 = vunpack.c.l.b16 %v1036
    %v1131 = vunpack.c.h.b16 %v1036
    %v1132 = vunpack.c.l.b16 %v1037
    %v1133 = vunpack.c.h.b16 %v1037
    %v1134 = vunpack.c.l.b16 %v1038
    %v1135 = vunpack.c.h.b16 %v1038
    %v1136 = vunpack.c.l.b16 %v1039
    %v1137 = vunpack.c.h.b16 %v1039
    %v1138 = vunpack.c.l.b16 %v1040
    %v1139 = vunpack.c.h.b16 %v1040
    %v1140 = vunpack.c.l.b16 %v1041
    %v1141 = vunpack.c.h.b16 %v1041
    %v1142 = vpack.c.b16 %v1082, %v1078
    %v1143 = vpack.c.b16 %v1083, %v1079
    %v1144 = vpack.c.b16 %v1084, %v1080
    %v1145 = vpack.c.b16 %v1085, %v1081
    %v1146 = vpack.c.b16 %v1090, %v1086
    %v1147 = vpack.c.b16 %v1091, %v1087
    %v1148 = vpack.c.b16 %v1092, %v1088
    %v1149 = vpack.c.b16 %v1093, %v1089
    %v1150 = vpack.c.b16 %v1098, %v1094
    %v1151 = vpack.c.b16 %v1099, %v1095
    %v1152 = vpack.c.b16 %v1100, %v1096
    %v1153 = vpack.c.b16 %v1101, %v1097
    %v1154 = vpack.c.b16 %v1106, %v1102
    %v1155 = vpack.c.b16 %v1107, %v1103
    %v1156 = vpack.c.b16 %v1108, %v1104
    %v1157 = vpack.c.b16 %v1109, %v1105
    %v1158 = vpack.c.b16 %v1114, %v1110
    %v1159 = vpack.c.b16 %v1115, %v1111
    %v1160 = vpack.c.b16 %v1116, %v1112
    %v1161 = vpack.c.b16 %v1117, %v1113
    %v1162 = vpack.c.b16 %v1122, %v1118
    %v1163 = vpack.c.b16 %v1123, %v1119
    %v1164 = vpack.c.b16 %v1124, %v1120
    %v1165 = vpack.c.b16 %v1125, %v1121
    %v1166 = vpack.c.b16 %v1130, %v1126
    %v1167 = vpack.c.b16 %v1131, %v1127
    %v1168 = vpack.c.b16 %v1132, %v1128
    %v1169 = vpack.c.b16 %v1133, %v1129
    %v1170 = vpack.c.b16 %v1138, %v1134
    %v1171 = vpack.c.b16 %v1139, %v1135
    %v1172 = vpack.c.b16 %v1140, %v1136
    %v1173 = vpack.c.b16 %v1141, %v1137
    %1206 = vmatprep.subr.bf16.mxu0 %v1143
    %1207 = vmatpush1.bf16.msra.mxu0 %v1142
    %1208 = vmatprep.subr.bf16.mxu0 %v1147
    %1209 = vmatpush1.bf16.msra.mxu0 %v1146
    %1210 = vmatprep.subr.bf16.mxu0 %v1151
    %1211 = vmatpush1.bf16.msra.mxu0 %v1150
    %1212 = vmatprep.subr.bf16.mxu0 %v1155
    %1213 = vmatpush1.bf16.msra.mxu0 %v1154
    %1214 = vmatprep.subr.bf16.mxu0 %v1159
    %1215 = vmatpush1.bf16.msra.mxu0 %v1158
    %1216 = vmatprep.subr.bf16.mxu0 %v1163
    %1217 = vmatpush1.bf16.msra.mxu0 %v1162
    %1218 = vmatprep.subr.bf16.mxu0 %v1167
    %1219 = vmatpush1.bf16.msra.mxu0 %v1166
    %1220 = vmatprep.subr.bf16.mxu0 %v1171
    %1221 = vmatpush1.bf16.msra.mxu0 %v1170
    %1222 = vmatprep.subr.bf16.mxu0 0
    %1223 = vmatpush1.bf16.msra.mxu0 0
    %1224 = vmatprep.subr.bf16.mxu0 0
    %1225 = vmatpush1.bf16.msra.mxu0 0
    %1226 = vmatprep.subr.bf16.mxu0 0
    %1227 = vmatpush1.bf16.msra.mxu0 0
    %1228 = vmatprep.subr.bf16.mxu0 0
    %1229 = vmatpush1.bf16.msra.mxu0 0
    %1230 = vmatprep.subr.bf16.mxu0 0
    %1231 = vmatpush1.bf16.msra.mxu0 0
    %1232 = vmatprep.subr.bf16.mxu0 0
    %1233 = vmatpush1.bf16.msra.mxu0 0
    %1234 = vmatprep.subr.bf16.mxu0 0
    %1235 = vmatpush1.bf16.msra.mxu0 0
    %1236 = vmatprep.subr.bf16.mxu0 0
    %1237 = vmatpush1.bf16.msra.mxu0 0
    %1238 = vmatprep.mubr.bf16.mxu0 0
    %1239 = vmatmul.mubr.bf16.gmra.mrb[0].mxu0 %v1043
    %v1240 = vpop.f32.mrb[0].mxu0
    %v1241 = vadd.f32 0.0, %v1240
    %v1242 = vpop.f32.mrb[0].mxu0
    %v1243 = vadd.f32 0.0, %v1242
    %v1244 = vpop.f32.mrb[0].mxu0
    %v1245 = vpop.f32.mrb[0].mxu0
    %1246 = vdwg.mxu0
    %1247 = vmatprep.subr.bf16.mxu0 %v1145
    %1248 = vmatpush1.bf16.msra.mxu0 %v1144
    %1249 = vmatprep.subr.bf16.mxu0 %v1149
    %1250 = vmatpush1.bf16.msra.mxu0 %v1148
    %1251 = vmatprep.subr.bf16.mxu0 %v1153
    %1252 = vmatpush1.bf16.msra.mxu0 %v1152
    %1253 = vmatprep.subr.bf16.mxu0 %v1157
    %1254 = vmatpush1.bf16.msra.mxu0 %v1156
    %1255 = vmatprep.subr.bf16.mxu0 %v1161
    %1256 = vmatpush1.bf16.msra.mxu0 %v1160
    %1257 = vmatprep.subr.bf16.mxu0 %v1165
    %1258 = vmatpush1.bf16.msra.mxu0 %v1164
    %1259 = vmatprep.subr.bf16.mxu0 %v1169
    %1260 = vmatpush1.bf16.msra.mxu0 %v1168
    %1261 = vmatprep.subr.bf16.mxu0 %v1173
    %1262 = vmatpush1.bf16.msra.mxu0 %v1172
    %1263 = vmatprep.subr.bf16.mxu0 0
    %1264 = vmatpush1.bf16.msra.mxu0 0
    %1265 = vmatprep.subr.bf16.mxu0 0
    %1266 = vmatpush1.bf16.msra.mxu0 0
    %1267 = vmatprep.subr.bf16.mxu0 0
    %1268 = vmatpush1.bf16.msra.mxu0 0
    %1269 = vmatprep.subr.bf16.mxu0 0
    %1270 = vmatpush1.bf16.msra.mxu0 0
    %1271 = vmatprep.subr.bf16.mxu0 0
    %1272 = vmatpush1.bf16.msra.mxu0 0
    %1273 = vmatprep.subr.bf16.mxu0 0
    %1274 = vmatpush1.bf16.msra.mxu0 0
    %1275 = vmatprep.subr.bf16.mxu0 0
    %1276 = vmatpush1.bf16.msra.mxu0 0
    %1277 = vmatprep.subr.bf16.mxu0 0
    %1278 = vmatpush1.bf16.msra.mxu0 0
    %1279 = vmatprep.mubr.bf16.mxu0 0
    %1280 = vmatmul.mubr.bf16.gmra.mrb[0].mxu0 %v1043
    %v1281 = vpop.f32.mrb[0].mxu0
    %v1282 = vadd.f32 0.0, %v1281
    %v1283 = vpop.f32.mrb[0].mxu0
    %v1284 = vadd.f32 0.0, %v1283
    %v1285 = vpop.f32.mrb[0].mxu0
    %v1286 = vpop.f32.mrb[0].mxu0
    %1287 = vdwg.mxu0
    %v1292 = vrot.slane %v1241, 6
    %v1293 = vrot.slane %v1243, 6
    %v1294 = vrot.slane %v1282, 6
    %v1295 = vrot.slane %v1284, 6
    %v1300 = vadd.f32 %v340, %v1292
    %v1301 = vadd.f32 %v342, %v1293
    %v1302 = vadd.f32 %v381, %v1294
    %v1303 = vadd.f32 %v383, %v1295
    %v1304 = vxor.u32 %v1300, 2147483648
    %v1305 = vxor.u32 %v1301, 2147483648
    %v1306 = vxor.u32 %v1302, 2147483648
    %v1307 = vmul.f32 %v1304, 1.442695
    %v1308 = vpow.pop %v1307
    %v1309 = vmul.f32 %v1305, 1.442695
    %v1310 = vpow.pop %v1309
    %v1311 = vmul.f32 %v1306, 1.442695
    %v1312 = vpow.pop %v1311
    %v1313 = vadd.f32 %v1308, 1.0
    %v1314 = vadd.f32 %v1310, 1.0
    %v1315 = vadd.f32 %v1312, 1.0
    %v1316 = vrcp.pop %v1313
    %v1317 = vmul.f32 1.0, %v1316
    %v1318 = vrcp.pop %v1314
    %v1319 = vmul.f32 1.0, %v1318
    %v1320 = vrcp.pop %v1315
    %v1321 = vmul.f32 1.0, %v1320
    %v1322 = vtanh.pop %v1303
    %v1324 = vrot.slane %v1005, 7
    %v1326 = vmul.f32 %v1319, %v1324
    %v1327 = vmul.f32 %v1317, %v1322
    %v1328 = vadd.f32 %v1326, %v1327
    %v1329 = vtanh.pop %v1328
    %v1330 = vmul.f32 %v1321, %v1329
    %1331 = vst [vmem:[#allocation2] sm:$0x4] %v1330
    %v1332 = vpack.c.bf16 %v1330, %v1330
    %v1333 = vld [vmem:[%s3] sm:$0xff]
    %v1334 = vld [vmem:[%s3 + $0x8] sm:$0xff]
    %v1335 = vld [vmem:[%s3 + $0x10] sm:$0xff]
    %v1336 = vld [vmem:[%s3 + $0x18] sm:$0xff]
    %v1337 = vld [vmem:[%s3 + $0x20] sm:$0xff]
    %v1338 = vld [vmem:[%s3 + $0x28] sm:$0xff]
    %v1339 = vld [vmem:[%s3 + $0x30] sm:$0xff]
    %v1340 = vld [vmem:[%s3 + $0x38] sm:$0xff]
    %v1341 = vld [vmem:[%s3 + $0x40] sm:$0xff]
    %v1342 = vld [vmem:[%s3 + $0x48] sm:$0xff]
    %v1343 = vld [vmem:[%s3 + $0x50] sm:$0xff]
    %v1344 = vld [vmem:[%s3 + $0x58] sm:$0xff]
    %v1345 = vld [vmem:[%s3 + $0x60] sm:$0xff]
    %v1346 = vld [vmem:[%s3 + $0x68] sm:$0xff]
    %v1347 = vld [vmem:[%s3 + $0x70] sm:$0xff]
    %v1348 = vld [vmem:[%s3 + $0x78] sm:$0xff]
    %v1349 = vld [vmem:[%s3 + $0x80] sm:$0xff]
    %v1350 = vld [vmem:[%s3 + $0x88] sm:$0xff]
    %v1351 = vld [vmem:[%s3 + $0x90] sm:$0xff]
    %v1352 = vld [vmem:[%s3 + $0x98] sm:$0xff]
    %v1353 = vld [vmem:[%s3 + $0xa0] sm:$0xff]
    %v1354 = vld [vmem:[%s3 + $0xa8] sm:$0xff]
    %v1355 = vld [vmem:[%s3 + $0xb0] sm:$0xff]
    %v1356 = vld [vmem:[%s3 + $0xb8] sm:$0xff]
    %v1357 = vld [vmem:[%s3 + $0xc0] sm:$0xff]
    %v1358 = vld [vmem:[%s3 + $0xc8] sm:$0xff]
    %v1359 = vld [vmem:[%s3 + $0xd0] sm:$0xff]
    %v1360 = vld [vmem:[%s3 + $0xd8] sm:$0xff]
    %v1361 = vld [vmem:[%s3 + $0xe0] sm:$0xff]
    %v1362 = vld [vmem:[%s3 + $0xe8] sm:$0xff]
    %v1363 = vld [vmem:[%s3 + $0xf0] sm:$0xff]
    %v1364 = vld [vmem:[%s3 + $0xf8] sm:$0xff]
    %v1366 = vrot.slane %v1332, 1
    %v1400 = vunpack.c.l.b16 %v1333
    %v1401 = vunpack.c.h.b16 %v1333
    %v1402 = vunpack.c.l.b16 %v1334
    %v1403 = vunpack.c.h.b16 %v1334
    %v1404 = vunpack.c.l.b16 %v1335
    %v1405 = vunpack.c.h.b16 %v1335
    %v1406 = vunpack.c.l.b16 %v1336
    %v1407 = vunpack.c.h.b16 %v1336
    %v1408 = vunpack.c.l.b16 %v1337
    %v1409 = vunpack.c.h.b16 %v1337
    %v1410 = vunpack.c.l.b16 %v1338
    %v1411 = vunpack.c.h.b16 %v1338
    %v1412 = vunpack.c.l.b16 %v1339
    %v1413 = vunpack.c.h.b16 %v1339
    %v1414 = vunpack.c.l.b16 %v1340
    %v1415 = vunpack.c.h.b16 %v1340
    %v1416 = vunpack.c.l.b16 %v1341
    %v1417 = vunpack.c.h.b16 %v1341
    %v1418 = vunpack.c.l.b16 %v1342
    %v1419 = vunpack.c.h.b16 %v1342
    %v1420 = vunpack.c.l.b16 %v1343
    %v1421 = vunpack.c.h.b16 %v1343
    %v1422 = vunpack.c.l.b16 %v1344
    %v1423 = vunpack.c.h.b16 %v1344
    %v1424 = vunpack.c.l.b16 %v1345
    %v1425 = vunpack.c.h.b16 %v1345
    %v1426 = vunpack.c.l.b16 %v1346
    %v1427 = vunpack.c.h.b16 %v1346
    %v1428 = vunpack.c.l.b16 %v1347
    %v1429 = vunpack.c.h.b16 %v1347
    %v1430 = vunpack.c.l.b16 %v1348
    %v1431 = vunpack.c.h.b16 %v1348
    %v1432 = vunpack.c.l.b16 %v1349
    %v1433 = vunpack.c.h.b16 %v1349
    %v1434 = vunpack.c.l.b16 %v1350
    %v1435 = vunpack.c.h.b16 %v1350
    %v1436 = vunpack.c.l.b16 %v1351
    %v1437 = vunpack.c.h.b16 %v1351
    %v1438 = vunpack.c.l.b16 %v1352
    %v1439 = vunpack.c.h.b16 %v1352
    %v1440 = vunpack.c.l.b16 %v1353
    %v1441 = vunpack.c.h.b16 %v1353
    %v1442 = vunpack.c.l.b16 %v1354
    %v1443 = vunpack.c.h.b16 %v1354
    %v1444 = vunpack.c.l.b16 %v1355
    %v1445 = vunpack.c.h.b16 %v1355
    %v1446 = vunpack.c.l.b16 %v1356
    %v1447 = vunpack.c.h.b16 %v1356
    %v1448 = vunpack.c.l.b16 %v1357
    %v1449 = vunpack.c.h.b16 %v1357
    %v1450 = vunpack.c.l.b16 %v1358
    %v1451 = vunpack.c.h.b16 %v1358
    %v1452 = vunpack.c.l.b16 %v1359
    %v1453 = vunpack.c.h.b16 %v1359
    %v1454 = vunpack.c.l.b16 %v1360
    %v1455 = vunpack.c.h.b16 %v1360
    %v1456 = vunpack.c.l.b16 %v1361
    %v1457 = vunpack.c.h.b16 %v1361
    %v1458 = vunpack.c.l.b16 %v1362
    %v1459 = vunpack.c.h.b16 %v1362
    %v1460 = vunpack.c.l.b16 %v1363
    %v1461 = vunpack.c.h.b16 %v1363
    %v1462 = vunpack.c.l.b16 %v1364
    %v1463 = vunpack.c.h.b16 %v1364
    %v1464 = vpack.c.b16 %v1404, %v1400
    %v1465 = vpack.c.b16 %v1405, %v1401
    %v1466 = vpack.c.b16 %v1406, %v1402
    %v1467 = vpack.c.b16 %v1407, %v1403
    %v1468 = vpack.c.b16 %v1412, %v1408
    %v1469 = vpack.c.b16 %v1413, %v1409
    %v1470 = vpack.c.b16 %v1414, %v1410
    %v1471 = vpack.c.b16 %v1415, %v1411
    %v1472 = vpack.c.b16 %v1420, %v1416
    %v1473 = vpack.c.b16 %v1421, %v1417
    %v1474 = vpack.c.b16 %v1422, %v1418
    %v1475 = vpack.c.b16 %v1423, %v1419
    %v1476 = vpack.c.b16 %v1428, %v1424
    %v1477 = vpack.c.b16 %v1429, %v1425
    %v1478 = vpack.c.b16 %v1430, %v1426
    %v1479 = vpack.c.b16 %v1431, %v1427
    %v1480 = vpack.c.b16 %v1436, %v1432
    %v1481 = vpack.c.b16 %v1437, %v1433
    %v1482 = vpack.c.b16 %v1438, %v1434
    %v1483 = vpack.c.b16 %v1439, %v1435
    %v1484 = vpack.c.b16 %v1444, %v1440
    %v1485 = vpack.c.b16 %v1445, %v1441
    %v1486 = vpack.c.b16 %v1446, %v1442
    %v1487 = vpack.c.b16 %v1447, %v1443
    %v1488 = vpack.c.b16 %v1452, %v1448
    %v1489 = vpack.c.b16 %v1453, %v1449
    %v1490 = vpack.c.b16 %v1454, %v1450
    %v1491 = vpack.c.b16 %v1455, %v1451
    %v1492 = vpack.c.b16 %v1460, %v1456
    %v1493 = vpack.c.b16 %v1461, %v1457
    %v1494 = vpack.c.b16 %v1462, %v1458
    %v1495 = vpack.c.b16 %v1463, %v1459
    %1528 = vmatprep.subr.bf16.mxu0 %v1465
    %1529 = vmatpush1.bf16.msra.mxu0 %v1464
    %1530 = vmatprep.subr.bf16.mxu0 %v1469
    %1531 = vmatpush1.bf16.msra.mxu0 %v1468
    %1532 = vmatprep.subr.bf16.mxu0 %v1473
    %1533 = vmatpush1.bf16.msra.mxu0 %v1472
    %1534 = vmatprep.subr.bf16.mxu0 %v1477
    %1535 = vmatpush1.bf16.msra.mxu0 %v1476
    %1536 = vmatprep.subr.bf16.mxu0 %v1481
    %1537 = vmatpush1.bf16.msra.mxu0 %v1480
    %1538 = vmatprep.subr.bf16.mxu0 %v1485
    %1539 = vmatpush1.bf16.msra.mxu0 %v1484
    %1540 = vmatprep.subr.bf16.mxu0 %v1489
    %1541 = vmatpush1.bf16.msra.mxu0 %v1488
    %1542 = vmatprep.subr.bf16.mxu0 %v1493
    %1543 = vmatpush1.bf16.msra.mxu0 %v1492
    %1544 = vmatprep.subr.bf16.mxu0 0
    %1545 = vmatpush1.bf16.msra.mxu0 0
    %1546 = vmatprep.subr.bf16.mxu0 0
    %1547 = vmatpush1.bf16.msra.mxu0 0
    %1548 = vmatprep.subr.bf16.mxu0 0
    %1549 = vmatpush1.bf16.msra.mxu0 0
    %1550 = vmatprep.subr.bf16.mxu0 0
    %1551 = vmatpush1.bf16.msra.mxu0 0
    %1552 = vmatprep.subr.bf16.mxu0 0
    %1553 = vmatpush1.bf16.msra.mxu0 0
    %1554 = vmatprep.subr.bf16.mxu0 0
    %1555 = vmatpush1.bf16.msra.mxu0 0
    %1556 = vmatprep.subr.bf16.mxu0 0
    %1557 = vmatpush1.bf16.msra.mxu0 0
    %1558 = vmatprep.subr.bf16.mxu0 0
    %1559 = vmatpush1.bf16.msra.mxu0 0
    %1560 = vmatprep.mubr.bf16.mxu0 0
    %1561 = vmatmul.mubr.bf16.gmra.mrb[0].mxu0 %v1366
    %v1562 = vpop.f32.mrb[0].mxu0
    %v1563 = vadd.f32 0.0, %v1562
    %v1564 = vpop.f32.mrb[0].mxu0
    %v1565 = vadd.f32 0.0, %v1564
    %v1566 = vpop.f32.mrb[0].mxu0
    %v1567 = vpop.f32.mrb[0].mxu0
    %1568 = vdwg.mxu0
    %1569 = vmatprep.subr.bf16.mxu0 %v1467
    %1570 = vmatpush1.bf16.msra.mxu0 %v1466
    %1571 = vmatprep.subr.bf16.mxu0 %v1471
    %1572 = vmatpush1.bf16.msra.mxu0 %v1470
    %1573 = vmatprep.subr.bf16.mxu0 %v1475
    %1574 = vmatpush1.bf16.msra.mxu0 %v1474
    %1575 = vmatprep.subr.bf16.mxu0 %v1479
    %1576 = vmatpush1.bf16.msra.mxu0 %v1478
    %1577 = vmatprep.subr.bf16.mxu0 %v1483
    %1578 = vmatpush1.bf16.msra.mxu0 %v1482
    %1579 = vmatprep.subr.bf16.mxu0 %v1487
    %1580 = vmatpush1.bf16.msra.mxu0 %v1486
    %1581 = vmatprep.subr.bf16.mxu0 %v1491
    %1582 = vmatpush1.bf16.msra.mxu0 %v1490
    %1583 = vmatprep.subr.bf16.mxu0 %v1495
    %1584 = vmatpush1.bf16.msra.mxu0 %v1494
    %1585 = vmatprep.subr.bf16.mxu0 0
    %1586 = vmatpush1.bf16.msra.mxu0 0
    %1587 = vmatprep.subr.bf16.mxu0 0
    %1588 = vmatpush1.bf16.msra.mxu0 0
    %1589 = vmatprep.subr.bf16.mxu0 0
    %1590 = vmatpush1.bf16.msra.mxu0 0
    %1591 = vmatprep.subr.bf16.mxu0 0
    %1592 = vmatpush1.bf16.msra.mxu0 0
    %1593 = vmatprep.subr.bf16.mxu0 0
    %1594 = vmatpush1.bf16.msra.mxu0 0
    %1595 = vmatprep.subr.bf16.mxu0 0
    %1596 = vmatpush1.bf16.msra.mxu0 0
    %1597 = vmatprep.subr.bf16.mxu0 0
    %1598 = vmatpush1.bf16.msra.mxu0 0
    %1599 = vmatprep.subr.bf16.mxu0 0
    %1600 = vmatpush1.bf16.msra.mxu0 0
    %1601 = vmatprep.mubr.bf16.mxu0 0
    %1602 = vmatmul.mubr.bf16.gmra.mrb[0].mxu0 %v1366
    %v1603 = vpop.f32.mrb[0].mxu0
    %v1604 = vadd.f32 0.0, %v1603
    %v1605 = vpop.f32.mrb[0].mxu0
    %v1606 = vadd.f32 0.0, %v1605
    %v1607 = vpop.f32.mrb[0].mxu0
    %v1608 = vpop.f32.mrb[0].mxu0
    %1609 = vdwg.mxu0
    %v1614 = vrot.slane %v1563, 5
    %v1615 = vrot.slane %v1565, 5
    %v1616 = vrot.slane %v1604, 5
    %v1617 = vrot.slane %v1606, 5
    %v1622 = vadd.f32 %v340, %v1614
    %v1623 = vadd.f32 %v342, %v1615
    %v1624 = vadd.f32 %v381, %v1616
    %v1625 = vadd.f32 %v383, %v1617
    %v1626 = vxor.u32 %v1622, 2147483648
    %v1627 = vxor.u32 %v1623, 2147483648
    %v1628 = vxor.u32 %v1624, 2147483648
    %v1629 = vmul.f32 %v1626, 1.442695
    %v1630 = vpow.pop %v1629
    %v1631 = vmul.f32 %v1627, 1.442695
    %v1632 = vpow.pop %v1631
    %v1633 = vmul.f32 %v1628, 1.442695
    %v1634 = vpow.pop %v1633
    %v1635 = vadd.f32 %v1630, 1.0
    %v1636 = vadd.f32 %v1632, 1.0
    %v1637 = vadd.f32 %v1634, 1.0
    %v1638 = vrcp.pop %v1635
    %v1639 = vmul.f32 1.0, %v1638
    %v1640 = vrcp.pop %v1636
    %v1641 = vmul.f32 1.0, %v1640
    %v1642 = vrcp.pop %v1637
    %v1643 = vmul.f32 1.0, %v1642
    %v1644 = vtanh.pop %v1625
    %v1646 = vrot.slane %v1328, 7
    %v1648 = vmul.f32 %v1641, %v1646
    %v1649 = vmul.f32 %v1639, %v1644
    %v1650 = vadd.f32 %v1648, %v1649
    %v1651 = vtanh.pop %v1650
    %v1652 = vmul.f32 %v1643, %v1651
    %1653 = vst [vmem:[#allocation2] sm:$0x8] %v1652
    %v1654 = vpack.c.bf16 %v1652, %v1652
    %v1655 = vld [vmem:[%s3] sm:$0xff]
    %v1656 = vld [vmem:[%s3 + $0x8] sm:$0xff]
    %v1657 = vld [vmem:[%s3 + $0x10] sm:$0xff]
    %v1658 = vld [vmem:[%s3 + $0x18] sm:$0xff]
    %v1659 = vld [vmem:[%s3 + $0x20] sm:$0xff]
    %v1660 = vld [vmem:[%s3 + $0x28] sm:$0xff]
    %v1661 = vld [vmem:[%s3 + $0x30] sm:$0xff]
    %v1662 = vld [vmem:[%s3 + $0x38] sm:$0xff]
    %v1663 = vld [vmem:[%s3 + $0x40] sm:$0xff]
    %v1664 = vld [vmem:[%s3 + $0x48] sm:$0xff]
    %v1665 = vld [vmem:[%s3 + $0x50] sm:$0xff]
    %v1666 = vld [vmem:[%s3 + $0x58] sm:$0xff]
    %v1667 = vld [vmem:[%s3 + $0x60] sm:$0xff]
    %v1668 = vld [vmem:[%s3 + $0x68] sm:$0xff]
    %v1669 = vld [vmem:[%s3 + $0x70] sm:$0xff]
    %v1670 = vld [vmem:[%s3 + $0x78] sm:$0xff]
    %v1671 = vld [vmem:[%s3 + $0x80] sm:$0xff]
    %v1672 = vld [vmem:[%s3 + $0x88] sm:$0xff]
    %v1673 = vld [vmem:[%s3 + $0x90] sm:$0xff]
    %v1674 = vld [vmem:[%s3 + $0x98] sm:$0xff]
    %v1675 = vld [vmem:[%s3 + $0xa0] sm:$0xff]
    %v1676 = vld [vmem:[%s3 + $0xa8] sm:$0xff]
    %v1677 = vld [vmem:[%s3 + $0xb0] sm:$0xff]
    %v1678 = vld [vmem:[%s3 + $0xb8] sm:$0xff]
    %v1679 = vld [vmem:[%s3 + $0xc0] sm:$0xff]
    %v1680 = vld [vmem:[%s3 + $0xc8] sm:$0xff]
    %v1681 = vld [vmem:[%s3 + $0xd0] sm:$0xff]
    %v1682 = vld [vmem:[%s3 + $0xd8] sm:$0xff]
    %v1683 = vld [vmem:[%s3 + $0xe0] sm:$0xff]
    %v1684 = vld [vmem:[%s3 + $0xe8] sm:$0xff]
    %v1685 = vld [vmem:[%s3 + $0xf0] sm:$0xff]
    %v1686 = vld [vmem:[%s3 + $0xf8] sm:$0xff]
    %v1688 = vshrl.u32 %v1654, 16
    %v1690 = vrot.slane %v1688, 1
    %v1724 = vunpack.c.l.b16 %v1655
    %v1725 = vunpack.c.h.b16 %v1655
    %v1726 = vunpack.c.l.b16 %v1656
    %v1727 = vunpack.c.h.b16 %v1656
    %v1728 = vunpack.c.l.b16 %v1657
    %v1729 = vunpack.c.h.b16 %v1657
    %v1730 = vunpack.c.l.b16 %v1658
    %v1731 = vunpack.c.h.b16 %v1658
    %v1732 = vunpack.c.l.b16 %v1659
    %v1733 = vunpack.c.h.b16 %v1659
    %v1734 = vunpack.c.l.b16 %v1660
    %v1735 = vunpack.c.h.b16 %v1660
    %v1736 = vunpack.c.l.b16 %v1661
    %v1737 = vunpack.c.h.b16 %v1661
    %v1738 = vunpack.c.l.b16 %v1662
    %v1739 = vunpack.c.h.b16 %v1662
    %v1740 = vunpack.c.l.b16 %v1663
    %v1741 = vunpack.c.h.b16 %v1663
    %v1742 = vunpack.c.l.b16 %v1664
    %v1743 = vunpack.c.h.b16 %v1664
    %v1744 = vunpack.c.l.b16 %v1665
    %v1745 = vunpack.c.h.b16 %v1665
    %v1746 = vunpack.c.l.b16 %v1666
    %v1747 = vunpack.c.h.b16 %v1666
    %v1748 = vunpack.c.l.b16 %v1667
    %v1749 = vunpack.c.h.b16 %v1667
    %v1750 = vunpack.c.l.b16 %v1668
    %v1751 = vunpack.c.h.b16 %v1668
    %v1752 = vunpack.c.l.b16 %v1669
    %v1753 = vunpack.c.h.b16 %v1669
    %v1754 = vunpack.c.l.b16 %v1670
    %v1755 = vunpack.c.h.b16 %v1670
    %v1756 = vunpack.c.l.b16 %v1671
    %v1757 = vunpack.c.h.b16 %v1671
    %v1758 = vunpack.c.l.b16 %v1672
    %v1759 = vunpack.c.h.b16 %v1672
    %v1760 = vunpack.c.l.b16 %v1673
    %v1761 = vunpack.c.h.b16 %v1673
    %v1762 = vunpack.c.l.b16 %v1674
    %v1763 = vunpack.c.h.b16 %v1674
    %v1764 = vunpack.c.l.b16 %v1675
    %v1765 = vunpack.c.h.b16 %v1675
    %v1766 = vunpack.c.l.b16 %v1676
    %v1767 = vunpack.c.h.b16 %v1676
    %v1768 = vunpack.c.l.b16 %v1677
    %v1769 = vunpack.c.h.b16 %v1677
    %v1770 = vunpack.c.l.b16 %v1678
    %v1771 = vunpack.c.h.b16 %v1678
    %v1772 = vunpack.c.l.b16 %v1679
    %v1773 = vunpack.c.h.b16 %v1679
    %v1774 = vunpack.c.l.b16 %v1680
    %v1775 = vunpack.c.h.b16 %v1680
    %v1776 = vunpack.c.l.b16 %v1681
    %v1777 = vunpack.c.h.b16 %v1681
    %v1778 = vunpack.c.l.b16 %v1682
    %v1779 = vunpack.c.h.b16 %v1682
    %v1780 = vunpack.c.l.b16 %v1683
    %v1781 = vunpack.c.h.b16 %v1683
    %v1782 = vunpack.c.l.b16 %v1684
    %v1783 = vunpack.c.h.b16 %v1684
    %v1784 = vunpack.c.l.b16 %v1685
    %v1785 = vunpack.c.h.b16 %v1685
    %v1786 = vunpack.c.l.b16 %v1686
    %v1787 = vunpack.c.h.b16 %v1686
    %v1788 = vpack.c.b16 %v1728, %v1724
    %v1789 = vpack.c.b16 %v1729, %v1725
    %v1790 = vpack.c.b16 %v1730, %v1726
    %v1791 = vpack.c.b16 %v1731, %v1727
    %v1792 = vpack.c.b16 %v1736, %v1732
    %v1793 = vpack.c.b16 %v1737, %v1733
    %v1794 = vpack.c.b16 %v1738, %v1734
    %v1795 = vpack.c.b16 %v1739, %v1735
    %v1796 = vpack.c.b16 %v1744, %v1740
    %v1797 = vpack.c.b16 %v1745, %v1741
    %v1798 = vpack.c.b16 %v1746, %v1742
    %v1799 = vpack.c.b16 %v1747, %v1743
    %v1800 = vpack.c.b16 %v1752, %v1748
    %v1801 = vpack.c.b16 %v1753, %v1749
    %v1802 = vpack.c.b16 %v1754, %v1750
    %v1803 = vpack.c.b16 %v1755, %v1751
    %v1804 = vpack.c.b16 %v1760, %v1756
    %v1805 = vpack.c.b16 %v1761, %v1757
    %v1806 = vpack.c.b16 %v1762, %v1758
    %v1807 = vpack.c.b16 %v1763, %v1759
    %v1808 = vpack.c.b16 %v1768, %v1764
    %v1809 = vpack.c.b16 %v1769, %v1765
    %v1810 = vpack.c.b16 %v1770, %v1766
    %v1811 = vpack.c.b16 %v1771, %v1767
    %v1812 = vpack.c.b16 %v1776, %v1772
    %v1813 = vpack.c.b16 %v1777, %v1773
    %v1814 = vpack.c.b16 %v1778, %v1774
    %v1815 = vpack.c.b16 %v1779, %v1775
    %v1816 = vpack.c.b16 %v1784, %v1780
    %v1817 = vpack.c.b16 %v1785, %v1781
    %v1818 = vpack.c.b16 %v1786, %v1782
    %v1819 = vpack.c.b16 %v1787, %v1783
    %1852 = vmatprep.subr.bf16.mxu0 %v1789
    %1853 = vmatpush1.bf16.msra.mxu0 %v1788
    %1854 = vmatprep.subr.bf16.mxu0 %v1793
    %1855 = vmatpush1.bf16.msra.mxu0 %v1792
    %1856 = vmatprep.subr.bf16.mxu0 %v1797
    %1857 = vmatpush1.bf16.msra.mxu0 %v1796
    %1858 = vmatprep.subr.bf16.mxu0 %v1801
    %1859 = vmatpush1.bf16.msra.mxu0 %v1800
    %1860 = vmatprep.subr.bf16.mxu0 %v1805
    %1861 = vmatpush1.bf16.msra.mxu0 %v1804
    %1862 = vmatprep.subr.bf16.mxu0 %v1809
    %1863 = vmatpush1.bf16.msra.mxu0 %v1808
    %1864 = vmatprep.subr.bf16.mxu0 %v1813
    %1865 = vmatpush1.bf16.msra.mxu0 %v1812
    %1866 = vmatprep.subr.bf16.mxu0 %v1817
    %1867 = vmatpush1.bf16.msra.mxu0 %v1816
    %1868 = vmatprep.subr.bf16.mxu0 0
    %1869 = vmatpush1.bf16.msra.mxu0 0
    %1870 = vmatprep.subr.bf16.mxu0 0
    %1871 = vmatpush1.bf16.msra.mxu0 0
    %1872 = vmatprep.subr.bf16.mxu0 0
    %1873 = vmatpush1.bf16.msra.mxu0 0
    %1874 = vmatprep.subr.bf16.mxu0 0
    %1875 = vmatpush1.bf16.msra.mxu0 0
    %1876 = vmatprep.subr.bf16.mxu0 0
    %1877 = vmatpush1.bf16.msra.mxu0 0
    %1878 = vmatprep.subr.bf16.mxu0 0
    %1879 = vmatpush1.bf16.msra.mxu0 0
    %1880 = vmatprep.subr.bf16.mxu0 0
    %1881 = vmatpush1.bf16.msra.mxu0 0
    %1882 = vmatprep.subr.bf16.mxu0 0
    %1883 = vmatpush1.bf16.msra.mxu0 0
    %1884 = vmatprep.mubr.bf16.mxu0 0
    %1885 = vmatmul.mubr.bf16.gmra.mrb[0].mxu0 %v1690
    %v1886 = vpop.f32.mrb[0].mxu0
    %v1887 = vadd.f32 0.0, %v1886
    %v1888 = vpop.f32.mrb[0].mxu0
    %v1889 = vadd.f32 0.0, %v1888
    %v1890 = vpop.f32.mrb[0].mxu0
    %v1891 = vpop.f32.mrb[0].mxu0
    %1892 = vdwg.mxu0
    %1893 = vmatprep.subr.bf16.mxu0 %v1791
    %1894 = vmatpush1.bf16.msra.mxu0 %v1790
    %1895 = vmatprep.subr.bf16.mxu0 %v1795
    %1896 = vmatpush1.bf16.msra.mxu0 %v1794
    %1897 = vmatprep.subr.bf16.mxu0 %v1799
    %1898 = vmatpush1.bf16.msra.mxu0 %v1798
    %1899 = vmatprep.subr.bf16.mxu0 %v1803
    %1900 = vmatpush1.bf16.msra.mxu0 %v1802
    %1901 = vmatprep.subr.bf16.mxu0 %v1807
    %1902 = vmatpush1.bf16.msra.mxu0 %v1806
    %1903 = vmatprep.subr.bf16.mxu0 %v1811
    %1904 = vmatpush1.bf16.msra.mxu0 %v1810
    %1905 = vmatprep.subr.bf16.mxu0 %v1815
    %1906 = vmatpush1.bf16.msra.mxu0 %v1814
    %1907 = vmatprep.subr.bf16.mxu0 %v1819
    %1908 = vmatpush1.bf16.msra.mxu0 %v1818
    %1909 = vmatprep.subr.bf16.mxu0 0
    %1910 = vmatpush1.bf16.msra.mxu0 0
    %1911 = vmatprep.subr.bf16.mxu0 0
    %1912 = vmatpush1.bf16.msra.mxu0 0
    %1913 = vmatprep.subr.bf16.mxu0 0
    %1914 = vmatpush1.bf16.msra.mxu0 0
    %1915 = vmatprep.subr.bf16.mxu0 0
    %1916 = vmatpush1.bf16.msra.mxu0 0
    %1917 = vmatprep.subr.bf16.mxu0 0
    %1918 = vmatpush1.bf16.msra.mxu0 0
    %1919 = vmatprep.subr.bf16.mxu0 0
    %1920 = vmatpush1.bf16.msra.mxu0 0
    %1921 = vmatprep.subr.bf16.mxu0 0
    %1922 = vmatpush1.bf16.msra.mxu0 0
    %1923 = vmatprep.subr.bf16.mxu0 0
    %1924 = vmatpush1.bf16.msra.mxu0 0
    %1925 = vmatprep.mubr.bf16.mxu0 0
    %1926 = vmatmul.mubr.bf16.gmra.mrb[0].mxu0 %v1690
    %v1927 = vpop.f32.mrb[0].mxu0
    %v1928 = vadd.f32 0.0, %v1927
    %v1929 = vpop.f32.mrb[0].mxu0
    %v1930 = vadd.f32 0.0, %v1929
    %v1931 = vpop.f32.mrb[0].mxu0
    %v1932 = vpop.f32.mrb[0].mxu0
    %1933 = vdwg.mxu0
    %v1938 = vrot.slane %v1887, 4
    %v1939 = vrot.slane %v1889, 4
    %v1940 = vrot.slane %v1928, 4
    %v1941 = vrot.slane %v1930, 4
    %v1946 = vadd.f32 %v340, %v1938
    %v1947 = vadd.f32 %v342, %v1939
    %v1948 = vadd.f32 %v381, %v1940
    %v1949 = vadd.f32 %v383, %v1941
    %v1950 = vxor.u32 %v1946, 2147483648
    %v1951 = vxor.u32 %v1947, 2147483648
    %v1952 = vxor.u32 %v1948, 2147483648
    %v1953 = vmul.f32 %v1950, 1.442695
    %v1954 = vpow.pop %v1953
    %v1955 = vmul.f32 %v1951, 1.442695
    %v1956 = vpow.pop %v1955
    %v1957 = vmul.f32 %v1952, 1.442695
    %v1958 = vpow.pop %v1957
    %v1959 = vadd.f32 %v1954, 1.0
    %v1960 = vadd.f32 %v1956, 1.0
    %v1961 = vadd.f32 %v1958, 1.0
    %v1962 = vrcp.pop %v1959
    %v1963 = vmul.f32 1.0, %v1962
    %v1964 = vrcp.pop %v1960
    %v1965 = vmul.f32 1.0, %v1964
    %v1966 = vrcp.pop %v1961
    %v1967 = vmul.f32 1.0, %v1966
    %v1968 = vtanh.pop %v1949
    %v1970 = vrot.slane %v1650, 7
    %v1972 = vmul.f32 %v1965, %v1970
    %v1973 = vmul.f32 %v1963, %v1968
    %v1974 = vadd.f32 %v1972, %v1973
    %v1975 = vtanh.pop %v1974
    %v1976 = vmul.f32 %v1967, %v1975
    %1977 = vst [vmem:[#allocation2] sm:$0x10] %v1976
    %v1978 = vpack.c.bf16 %v1976, %v1976
    %v1979 = vld [vmem:[%s3] sm:$0xff]
    %v1980 = vld [vmem:[%s3 + $0x8] sm:$0xff]
    %v1981 = vld [vmem:[%s3 + $0x10] sm:$0xff]
    %v1982 = vld [vmem:[%s3 + $0x18] sm:$0xff]
    %v1983 = vld [vmem:[%s3 + $0x20] sm:$0xff]
    %v1984 = vld [vmem:[%s3 + $0x28] sm:$0xff]
    %v1985 = vld [vmem:[%s3 + $0x30] sm:$0xff]
    %v1986 = vld [vmem:[%s3 + $0x38] sm:$0xff]
    %v1987 = vld [vmem:[%s3 + $0x40] sm:$0xff]
    %v1988 = vld [vmem:[%s3 + $0x48] sm:$0xff]
    %v1989 = vld [vmem:[%s3 + $0x50] sm:$0xff]
    %v1990 = vld [vmem:[%s3 + $0x58] sm:$0xff]
    %v1991 = vld [vmem:[%s3 + $0x60] sm:$0xff]
    %v1992 = vld [vmem:[%s3 + $0x68] sm:$0xff]
    %v1993 = vld [vmem:[%s3 + $0x70] sm:$0xff]
    %v1994 = vld [vmem:[%s3 + $0x78] sm:$0xff]
    %v1995 = vld [vmem:[%s3 + $0x80] sm:$0xff]
    %v1996 = vld [vmem:[%s3 + $0x88] sm:$0xff]
    %v1997 = vld [vmem:[%s3 + $0x90] sm:$0xff]
    %v1998 = vld [vmem:[%s3 + $0x98] sm:$0xff]
    %v1999 = vld [vmem:[%s3 + $0xa0] sm:$0xff]
    %v2000 = vld [vmem:[%s3 + $0xa8] sm:$0xff]
    %v2001 = vld [vmem:[%s3 + $0xb0] sm:$0xff]
    %v2002 = vld [vmem:[%s3 + $0xb8] sm:$0xff]
    %v2003 = vld [vmem:[%s3 + $0xc0] sm:$0xff]
    %v2004 = vld [vmem:[%s3 + $0xc8] sm:$0xff]
    %v2005 = vld [vmem:[%s3 + $0xd0] sm:$0xff]
    %v2006 = vld [vmem:[%s3 + $0xd8] sm:$0xff]
    %v2007 = vld [vmem:[%s3 + $0xe0] sm:$0xff]
    %v2008 = vld [vmem:[%s3 + $0xe8] sm:$0xff]
    %v2009 = vld [vmem:[%s3 + $0xf0] sm:$0xff]
    %v2010 = vld [vmem:[%s3 + $0xf8] sm:$0xff]
    %v2012 = vrot.slane %v1978, 2
    %v2046 = vunpack.c.l.b16 %v1979
    %v2047 = vunpack.c.h.b16 %v1979
    %v2048 = vunpack.c.l.b16 %v1980
    %v2049 = vunpack.c.h.b16 %v1980
    %v2050 = vunpack.c.l.b16 %v1981
    %v2051 = vunpack.c.h.b16 %v1981
    %v2052 = vunpack.c.l.b16 %v1982
    %v2053 = vunpack.c.h.b16 %v1982
    %v2054 = vunpack.c.l.b16 %v1983
    %v2055 = vunpack.c.h.b16 %v1983
    %v2056 = vunpack.c.l.b16 %v1984
    %v2057 = vunpack.c.h.b16 %v1984
    %v2058 = vunpack.c.l.b16 %v1985
    %v2059 = vunpack.c.h.b16 %v1985
    %v2060 = vunpack.c.l.b16 %v1986
    %v2061 = vunpack.c.h.b16 %v1986
    %v2062 = vunpack.c.l.b16 %v1987
    %v2063 = vunpack.c.h.b16 %v1987
    %v2064 = vunpack.c.l.b16 %v1988
    %v2065 = vunpack.c.h.b16 %v1988
    %v2066 = vunpack.c.l.b16 %v1989
    %v2067 = vunpack.c.h.b16 %v1989
    %v2068 = vunpack.c.l.b16 %v1990
    %v2069 = vunpack.c.h.b16 %v1990
    %v2070 = vunpack.c.l.b16 %v1991
    %v2071 = vunpack.c.h.b16 %v1991
    %v2072 = vunpack.c.l.b16 %v1992
    %v2073 = vunpack.c.h.b16 %v1992
    %v2074 = vunpack.c.l.b16 %v1993
    %v2075 = vunpack.c.h.b16 %v1993
    %v2076 = vunpack.c.l.b16 %v1994
    %v2077 = vunpack.c.h.b16 %v1994
    %v2078 = vunpack.c.l.b16 %v1995
    %v2079 = vunpack.c.h.b16 %v1995
    %v2080 = vunpack.c.l.b16 %v1996
    %v2081 = vunpack.c.h.b16 %v1996
    %v2082 = vunpack.c.l.b16 %v1997
    %v2083 = vunpack.c.h.b16 %v1997
    %v2084 = vunpack.c.l.b16 %v1998
    %v2085 = vunpack.c.h.b16 %v1998
    %v2086 = vunpack.c.l.b16 %v1999
    %v2087 = vunpack.c.h.b16 %v1999
    %v2088 = vunpack.c.l.b16 %v2000
    %v2089 = vunpack.c.h.b16 %v2000
    %v2090 = vunpack.c.l.b16 %v2001
    %v2091 = vunpack.c.h.b16 %v2001
    %v2092 = vunpack.c.l.b16 %v2002
    %v2093 = vunpack.c.h.b16 %v2002
    %v2094 = vunpack.c.l.b16 %v2003
    %v2095 = vunpack.c.h.b16 %v2003
    %v2096 = vunpack.c.l.b16 %v2004
    %v2097 = vunpack.c.h.b16 %v2004
    %v2098 = vunpack.c.l.b16 %v2005
    %v2099 = vunpack.c.h.b16 %v2005
    %v2100 = vunpack.c.l.b16 %v2006
    %v2101 = vunpack.c.h.b16 %v2006
    %v2102 = vunpack.c.l.b16 %v2007
    %v2103 = vunpack.c.h.b16 %v2007
    %v2104 = vunpack.c.l.b16 %v2008
    %v2105 = vunpack.c.h.b16 %v2008
    %v2106 = vunpack.c.l.b16 %v2009
    %v2107 = vunpack.c.h.b16 %v2009
    %v2108 = vunpack.c.l.b16 %v2010
    %v2109 = vunpack.c.h.b16 %v2010
    %v2110 = vpack.c.b16 %v2050, %v2046
    %v2111 = vpack.c.b16 %v2051, %v2047
    %v2112 = vpack.c.b16 %v2052, %v2048
    %v2113 = vpack.c.b16 %v2053, %v2049
    %v2114 = vpack.c.b16 %v2058, %v2054
    %v2115 = vpack.c.b16 %v2059, %v2055
    %v2116 = vpack.c.b16 %v2060, %v2056
    %v2117 = vpack.c.b16 %v2061, %v2057
    %v2118 = vpack.c.b16 %v2066, %v2062
    %v2119 = vpack.c.b16 %v2067, %v2063
    %v2120 = vpack.c.b16 %v2068, %v2064
    %v2121 = vpack.c.b16 %v2069, %v2065
    %v2122 = vpack.c.b16 %v2074, %v2070
    %v2123 = vpack.c.b16 %v2075, %v2071
    %v2124 = vpack.c.b16 %v2076, %v2072
    %v2125 = vpack.c.b16 %v2077, %v2073
    %v2126 = vpack.c.b16 %v2082, %v2078
    %v2127 = vpack.c.b16 %v2083, %v2079
    %v2128 = vpack.c.b16 %v2084, %v2080
    %v2129 = vpack.c.b16 %v2085, %v2081
    %v2130 = vpack.c.b16 %v2090, %v2086
    %v2131 = vpack.c.b16 %v2091, %v2087
    %v2132 = vpack.c.b16 %v2092, %v2088
    %v2133 = vpack.c.b16 %v2093, %v2089
    %v2134 = vpack.c.b16 %v2098, %v2094
    %v2135 = vpack.c.b16 %v2099, %v2095
    %v2136 = vpack.c.b16 %v2100, %v2096
    %v2137 = vpack.c.b16 %v2101, %v2097
    %v2138 = vpack.c.b16 %v2106, %v2102
    %v2139 = vpack.c.b16 %v2107, %v2103
    %v2140 = vpack.c.b16 %v2108, %v2104
    %v2141 = vpack.c.b16 %v2109, %v2105
    %2174 = vmatprep.subr.bf16.mxu0 %v2111
    %2175 = vmatpush1.bf16.msra.mxu0 %v2110
    %2176 = vmatprep.subr.bf16.mxu0 %v2115
    %2177 = vmatpush1.bf16.msra.mxu0 %v2114
    %2178 = vmatprep.subr.bf16.mxu0 %v2119
    %2179 = vmatpush1.bf16.msra.mxu0 %v2118
    %2180 = vmatprep.subr.bf16.mxu0 %v2123
    %2181 = vmatpush1.bf16.msra.mxu0 %v2122
    %2182 = vmatprep.subr.bf16.mxu0 %v2127
    %2183 = vmatpush1.bf16.msra.mxu0 %v2126
    %2184 = vmatprep.subr.bf16.mxu0 %v2131
    %2185 = vmatpush1.bf16.msra.mxu0 %v2130
    %2186 = vmatprep.subr.bf16.mxu0 %v2135
    %2187 = vmatpush1.bf16.msra.mxu0 %v2134
    %2188 = vmatprep.subr.bf16.mxu0 %v2139
    %2189 = vmatpush1.bf16.msra.mxu0 %v2138
    %2190 = vmatprep.subr.bf16.mxu0 0
    %2191 = vmatpush1.bf16.msra.mxu0 0
    %2192 = vmatprep.subr.bf16.mxu0 0
    %2193 = vmatpush1.bf16.msra.mxu0 0
    %2194 = vmatprep.subr.bf16.mxu0 0
    %2195 = vmatpush1.bf16.msra.mxu0 0
    %2196 = vmatprep.subr.bf16.mxu0 0
    %2197 = vmatpush1.bf16.msra.mxu0 0
    %2198 = vmatprep.subr.bf16.mxu0 0
    %2199 = vmatpush1.bf16.msra.mxu0 0
    %2200 = vmatprep.subr.bf16.mxu0 0
    %2201 = vmatpush1.bf16.msra.mxu0 0
    %2202 = vmatprep.subr.bf16.mxu0 0
    %2203 = vmatpush1.bf16.msra.mxu0 0
    %2204 = vmatprep.subr.bf16.mxu0 0
    %2205 = vmatpush1.bf16.msra.mxu0 0
    %2206 = vmatprep.mubr.bf16.mxu0 0
    %2207 = vmatmul.mubr.bf16.gmra.mrb[0].mxu0 %v2012
    %v2208 = vpop.f32.mrb[0].mxu0
    %v2209 = vadd.f32 0.0, %v2208
    %v2210 = vpop.f32.mrb[0].mxu0
    %v2211 = vadd.f32 0.0, %v2210
    %v2212 = vpop.f32.mrb[0].mxu0
    %v2213 = vpop.f32.mrb[0].mxu0
    %2214 = vdwg.mxu0
    %2215 = vmatprep.subr.bf16.mxu0 %v2113
    %2216 = vmatpush1.bf16.msra.mxu0 %v2112
    %2217 = vmatprep.subr.bf16.mxu0 %v2117
    %2218 = vmatpush1.bf16.msra.mxu0 %v2116
    %2219 = vmatprep.subr.bf16.mxu0 %v2121
    %2220 = vmatpush1.bf16.msra.mxu0 %v2120
    %2221 = vmatprep.subr.bf16.mxu0 %v2125
    %2222 = vmatpush1.bf16.msra.mxu0 %v2124
    %2223 = vmatprep.subr.bf16.mxu0 %v2129
    %2224 = vmatpush1.bf16.msra.mxu0 %v2128
    %2225 = vmatprep.subr.bf16.mxu0 %v2133
    %2226 = vmatpush1.bf16.msra.mxu0 %v2132
    %2227 = vmatprep.subr.bf16.mxu0 %v2137
    %2228 = vmatpush1.bf16.msra.mxu0 %v2136
    %2229 = vmatprep.subr.bf16.mxu0 %v2141
    %2230 = vmatpush1.bf16.msra.mxu0 %v2140
    %2231 = vmatprep.subr.bf16.mxu0 0
    %2232 = vmatpush1.bf16.msra.mxu0 0
    %2233 = vmatprep.subr.bf16.mxu0 0
    %2234 = vmatpush1.bf16.msra.mxu0 0
    %2235 = vmatprep.subr.bf16.mxu0 0
    %2236 = vmatpush1.bf16.msra.mxu0 0
    %2237 = vmatprep.subr.bf16.mxu0 0
    %2238 = vmatpush1.bf16.msra.mxu0 0
    %2239 = vmatprep.subr.bf16.mxu0 0
    %2240 = vmatpush1.bf16.msra.mxu0 0
    %2241 = vmatprep.subr.bf16.mxu0 0
    %2242 = vmatpush1.bf16.msra.mxu0 0
    %2243 = vmatprep.subr.bf16.mxu0 0
    %2244 = vmatpush1.bf16.msra.mxu0 0
    %2245 = vmatprep.subr.bf16.mxu0 0
    %2246 = vmatpush1.bf16.msra.mxu0 0
    %2247 = vmatprep.mubr.bf16.mxu0 0
    %2248 = vmatmul.mubr.bf16.gmra.mrb[0].mxu0 %v2012
    %v2249 = vpop.f32.mrb[0].mxu0
    %v2250 = vadd.f32 0.0, %v2249
    %v2251 = vpop.f32.mrb[0].mxu0
    %v2252 = vadd.f32 0.0, %v2251
    %v2253 = vpop.f32.mrb[0].mxu0
    %v2254 = vpop.f32.mrb[0].mxu0
    %2255 = vdwg.mxu0
    %v2260 = vrot.slane %v2209, 3
    %v2261 = vrot.slane %v2211, 3
    %v2262 = vrot.slane %v2250, 3
    %v2263 = vrot.slane %v2252, 3
    %v2268 = vadd.f32 %v340, %v2260
    %v2269 = vadd.f32 %v342, %v2261
    %v2270 = vadd.f32 %v381, %v2262
    %v2271 = vadd.f32 %v383, %v2263
    %v2272 = vxor.u32 %v2268, 2147483648
    %v2273 = vxor.u32 %v2269, 2147483648
    %v2274 = vxor.u32 %v2270, 2147483648
    %v2275 = vmul.f32 %v2272, 1.442695
    %v2276 = vpow.pop %v2275
    %v2277 = vmul.f32 %v2273, 1.442695
    %v2278 = vpow.pop %v2277
    %v2279 = vmul.f32 %v2274, 1.442695
    %v2280 = vpow.pop %v2279
    %v2281 = vadd.f32 %v2276, 1.0
    %v2282 = vadd.f32 %v2278, 1.0
    %v2283 = vadd.f32 %v2280, 1.0
    %v2284 = vrcp.pop %v2281
    %v2285 = vmul.f32 1.0, %v2284
    %v2286 = vrcp.pop %v2282
    %v2287 = vmul.f32 1.0, %v2286
    %v2288 = vrcp.pop %v2283
    %v2289 = vmul.f32 1.0, %v2288
    %v2290 = vtanh.pop %v2271
    %v2292 = vrot.slane %v1974, 7
    %v2294 = vmul.f32 %v2287, %v2292
    %v2295 = vmul.f32 %v2285, %v2290
    %v2296 = vadd.f32 %v2294, %v2295
    %v2297 = vtanh.pop %v2296
    %v2298 = vmul.f32 %v2289, %v2297
    %2299 = vst [vmem:[#allocation2] sm:$0x20] %v2298
    %v2300 = vpack.c.bf16 %v2298, %v2298
    %v2301 = vld [vmem:[%s3] sm:$0xff]
    %v2302 = vld [vmem:[%s3 + $0x8] sm:$0xff]
    %v2303 = vld [vmem:[%s3 + $0x10] sm:$0xff]
    %v2304 = vld [vmem:[%s3 + $0x18] sm:$0xff]
    %v2305 = vld [vmem:[%s3 + $0x20] sm:$0xff]
    %v2306 = vld [vmem:[%s3 + $0x28] sm:$0xff]
    %v2307 = vld [vmem:[%s3 + $0x30] sm:$0xff]
    %v2308 = vld [vmem:[%s3 + $0x38] sm:$0xff]
    %v2309 = vld [vmem:[%s3 + $0x40] sm:$0xff]
    %v2310 = vld [vmem:[%s3 + $0x48] sm:$0xff]
    %v2311 = vld [vmem:[%s3 + $0x50] sm:$0xff]
    %v2312 = vld [vmem:[%s3 + $0x58] sm:$0xff]
    %v2313 = vld [vmem:[%s3 + $0x60] sm:$0xff]
    %v2314 = vld [vmem:[%s3 + $0x68] sm:$0xff]
    %v2315 = vld [vmem:[%s3 + $0x70] sm:$0xff]
    %v2316 = vld [vmem:[%s3 + $0x78] sm:$0xff]
    %v2317 = vld [vmem:[%s3 + $0x80] sm:$0xff]
    %v2318 = vld [vmem:[%s3 + $0x88] sm:$0xff]
    %v2319 = vld [vmem:[%s3 + $0x90] sm:$0xff]
    %v2320 = vld [vmem:[%s3 + $0x98] sm:$0xff]
    %v2321 = vld [vmem:[%s3 + $0xa0] sm:$0xff]
    %v2322 = vld [vmem:[%s3 + $0xa8] sm:$0xff]
    %v2323 = vld [vmem:[%s3 + $0xb0] sm:$0xff]
    %v2324 = vld [vmem:[%s3 + $0xb8] sm:$0xff]
    %v2325 = vld [vmem:[%s3 + $0xc0] sm:$0xff]
    %v2326 = vld [vmem:[%s3 + $0xc8] sm:$0xff]
    %v2327 = vld [vmem:[%s3 + $0xd0] sm:$0xff]
    %v2328 = vld [vmem:[%s3 + $0xd8] sm:$0xff]
    %v2329 = vld [vmem:[%s3 + $0xe0] sm:$0xff]
    %v2330 = vld [vmem:[%s3 + $0xe8] sm:$0xff]
    %v2331 = vld [vmem:[%s3 + $0xf0] sm:$0xff]
    %v2332 = vld [vmem:[%s3 + $0xf8] sm:$0xff]
    %v2334 = vshrl.u32 %v2300, 16
    %v2336 = vrot.slane %v2334, 2
    %v2370 = vunpack.c.l.b16 %v2301
    %v2371 = vunpack.c.h.b16 %v2301
    %v2372 = vunpack.c.l.b16 %v2302
    %v2373 = vunpack.c.h.b16 %v2302
    %v2374 = vunpack.c.l.b16 %v2303
    %v2375 = vunpack.c.h.b16 %v2303
    %v2376 = vunpack.c.l.b16 %v2304
    %v2377 = vunpack.c.h.b16 %v2304
    %v2378 = vunpack.c.l.b16 %v2305
    %v2379 = vunpack.c.h.b16 %v2305
    %v2380 = vunpack.c.l.b16 %v2306
    %v2381 = vunpack.c.h.b16 %v2306
    %v2382 = vunpack.c.l.b16 %v2307
    %v2383 = vunpack.c.h.b16 %v2307
    %v2384 = vunpack.c.l.b16 %v2308
    %v2385 = vunpack.c.h.b16 %v2308
    %v2386 = vunpack.c.l.b16 %v2309
    %v2387 = vunpack.c.h.b16 %v2309
    %v2388 = vunpack.c.l.b16 %v2310
    %v2389 = vunpack.c.h.b16 %v2310
    %v2390 = vunpack.c.l.b16 %v2311
    %v2391 = vunpack.c.h.b16 %v2311
    %v2392 = vunpack.c.l.b16 %v2312
    %v2393 = vunpack.c.h.b16 %v2312
    %v2394 = vunpack.c.l.b16 %v2313
    %v2395 = vunpack.c.h.b16 %v2313
    %v2396 = vunpack.c.l.b16 %v2314
    %v2397 = vunpack.c.h.b16 %v2314
    %v2398 = vunpack.c.l.b16 %v2315
    %v2399 = vunpack.c.h.b16 %v2315
    %v2400 = vunpack.c.l.b16 %v2316
    %v2401 = vunpack.c.h.b16 %v2316
    %v2402 = vunpack.c.l.b16 %v2317
    %v2403 = vunpack.c.h.b16 %v2317
    %v2404 = vunpack.c.l.b16 %v2318
    %v2405 = vunpack.c.h.b16 %v2318
    %v2406 = vunpack.c.l.b16 %v2319
    %v2407 = vunpack.c.h.b16 %v2319
    %v2408 = vunpack.c.l.b16 %v2320
    %v2409 = vunpack.c.h.b16 %v2320
    %v2410 = vunpack.c.l.b16 %v2321
    %v2411 = vunpack.c.h.b16 %v2321
    %v2412 = vunpack.c.l.b16 %v2322
    %v2413 = vunpack.c.h.b16 %v2322
    %v2414 = vunpack.c.l.b16 %v2323
    %v2415 = vunpack.c.h.b16 %v2323
    %v2416 = vunpack.c.l.b16 %v2324
    %v2417 = vunpack.c.h.b16 %v2324
    %v2418 = vunpack.c.l.b16 %v2325
    %v2419 = vunpack.c.h.b16 %v2325
    %v2420 = vunpack.c.l.b16 %v2326
    %v2421 = vunpack.c.h.b16 %v2326
    %v2422 = vunpack.c.l.b16 %v2327
    %v2423 = vunpack.c.h.b16 %v2327
    %v2424 = vunpack.c.l.b16 %v2328
    %v2425 = vunpack.c.h.b16 %v2328
    %v2426 = vunpack.c.l.b16 %v2329
    %v2427 = vunpack.c.h.b16 %v2329
    %v2428 = vunpack.c.l.b16 %v2330
    %v2429 = vunpack.c.h.b16 %v2330
    %v2430 = vunpack.c.l.b16 %v2331
    %v2431 = vunpack.c.h.b16 %v2331
    %v2432 = vunpack.c.l.b16 %v2332
    %v2433 = vunpack.c.h.b16 %v2332
    %v2434 = vpack.c.b16 %v2374, %v2370
    %v2435 = vpack.c.b16 %v2375, %v2371
    %v2436 = vpack.c.b16 %v2376, %v2372
    %v2437 = vpack.c.b16 %v2377, %v2373
    %v2438 = vpack.c.b16 %v2382, %v2378
    %v2439 = vpack.c.b16 %v2383, %v2379
    %v2440 = vpack.c.b16 %v2384, %v2380
    %v2441 = vpack.c.b16 %v2385, %v2381
    %v2442 = vpack.c.b16 %v2390, %v2386
    %v2443 = vpack.c.b16 %v2391, %v2387
    %v2444 = vpack.c.b16 %v2392, %v2388
    %v2445 = vpack.c.b16 %v2393, %v2389
    %v2446 = vpack.c.b16 %v2398, %v2394
    %v2447 = vpack.c.b16 %v2399, %v2395
    %v2448 = vpack.c.b16 %v2400, %v2396
    %v2449 = vpack.c.b16 %v2401, %v2397
    %v2450 = vpack.c.b16 %v2406, %v2402
    %v2451 = vpack.c.b16 %v2407, %v2403
    %v2452 = vpack.c.b16 %v2408, %v2404
    %v2453 = vpack.c.b16 %v2409, %v2405
    %v2454 = vpack.c.b16 %v2414, %v2410
    %v2455 = vpack.c.b16 %v2415, %v2411
    %v2456 = vpack.c.b16 %v2416, %v2412
    %v2457 = vpack.c.b16 %v2417, %v2413
    %v2458 = vpack.c.b16 %v2422, %v2418
    %v2459 = vpack.c.b16 %v2423, %v2419
    %v2460 = vpack.c.b16 %v2424, %v2420
    %v2461 = vpack.c.b16 %v2425, %v2421
    %v2462 = vpack.c.b16 %v2430, %v2426
    %v2463 = vpack.c.b16 %v2431, %v2427
    %v2464 = vpack.c.b16 %v2432, %v2428
    %v2465 = vpack.c.b16 %v2433, %v2429
    %2498 = vmatprep.subr.bf16.mxu0 %v2435
    %2499 = vmatpush1.bf16.msra.mxu0 %v2434
    %2500 = vmatprep.subr.bf16.mxu0 %v2439
    %2501 = vmatpush1.bf16.msra.mxu0 %v2438
    %2502 = vmatprep.subr.bf16.mxu0 %v2443
    %2503 = vmatpush1.bf16.msra.mxu0 %v2442
    %2504 = vmatprep.subr.bf16.mxu0 %v2447
    %2505 = vmatpush1.bf16.msra.mxu0 %v2446
    %2506 = vmatprep.subr.bf16.mxu0 %v2451
    %2507 = vmatpush1.bf16.msra.mxu0 %v2450
    %2508 = vmatprep.subr.bf16.mxu0 %v2455
    %2509 = vmatpush1.bf16.msra.mxu0 %v2454
    %2510 = vmatprep.subr.bf16.mxu0 %v2459
    %2511 = vmatpush1.bf16.msra.mxu0 %v2458
    %2512 = vmatprep.subr.bf16.mxu0 %v2463
    %2513 = vmatpush1.bf16.msra.mxu0 %v2462
    %2514 = vmatprep.subr.bf16.mxu0 0
    %2515 = vmatpush1.bf16.msra.mxu0 0
    %2516 = vmatprep.subr.bf16.mxu0 0
    %2517 = vmatpush1.bf16.msra.mxu0 0
    %2518 = vmatprep.subr.bf16.mxu0 0
    %2519 = vmatpush1.bf16.msra.mxu0 0
    %2520 = vmatprep.subr.bf16.mxu0 0
    %2521 = vmatpush1.bf16.msra.mxu0 0
    %2522 = vmatprep.subr.bf16.mxu0 0
    %2523 = vmatpush1.bf16.msra.mxu0 0
    %2524 = vmatprep.subr.bf16.mxu0 0
    %2525 = vmatpush1.bf16.msra.mxu0 0
    %2526 = vmatprep.subr.bf16.mxu0 0
    %2527 = vmatpush1.bf16.msra.mxu0 0
    %2528 = vmatprep.subr.bf16.mxu0 0
    %2529 = vmatpush1.bf16.msra.mxu0 0
    %2530 = vmatprep.mubr.bf16.mxu0 0
    %2531 = vmatmul.mubr.bf16.gmra.mrb[0].mxu0 %v2336
    %v2532 = vpop.f32.mrb[0].mxu0
    %v2533 = vadd.f32 0.0, %v2532
    %v2534 = vpop.f32.mrb[0].mxu0
    %v2535 = vadd.f32 0.0, %v2534
    %v2536 = vpop.f32.mrb[0].mxu0
    %v2537 = vpop.f32.mrb[0].mxu0
    %2538 = vdwg.mxu0
    %2539 = vmatprep.subr.bf16.mxu0 %v2437
    %2540 = vmatpush1.bf16.msra.mxu0 %v2436
    %2541 = vmatprep.subr.bf16.mxu0 %v2441
    %2542 = vmatpush1.bf16.msra.mxu0 %v2440
    %2543 = vmatprep.subr.bf16.mxu0 %v2445
    %2544 = vmatpush1.bf16.msra.mxu0 %v2444
    %2545 = vmatprep.subr.bf16.mxu0 %v2449
    %2546 = vmatpush1.bf16.msra.mxu0 %v2448
    %2547 = vmatprep.subr.bf16.mxu0 %v2453
    %2548 = vmatpush1.bf16.msra.mxu0 %v2452
    %2549 = vmatprep.subr.bf16.mxu0 %v2457
    %2550 = vmatpush1.bf16.msra.mxu0 %v2456
    %2551 = vmatprep.subr.bf16.mxu0 %v2461
    %2552 = vmatpush1.bf16.msra.mxu0 %v2460
    %2553 = vmatprep.subr.bf16.mxu0 %v2465
    %2554 = vmatpush1.bf16.msra.mxu0 %v2464
    %2555 = vmatprep.subr.bf16.mxu0 0
    %2556 = vmatpush1.bf16.msra.mxu0 0
    %2557 = vmatprep.subr.bf16.mxu0 0
    %2558 = vmatpush1.bf16.msra.mxu0 0
    %2559 = vmatprep.subr.bf16.mxu0 0
    %2560 = vmatpush1.bf16.msra.mxu0 0
    %2561 = vmatprep.subr.bf16.mxu0 0
    %2562 = vmatpush1.bf16.msra.mxu0 0
    %2563 = vmatprep.subr.bf16.mxu0 0
    %2564 = vmatpush1.bf16.msra.mxu0 0
    %2565 = vmatprep.subr.bf16.mxu0 0
    %2566 = vmatpush1.bf16.msra.mxu0 0
    %2567 = vmatprep.subr.bf16.mxu0 0
    %2568 = vmatpush1.bf16.msra.mxu0 0
    %2569 = vmatprep.subr.bf16.mxu0 0
    %2570 = vmatpush1.bf16.msra.mxu0 0
    %2571 = vmatprep.mubr.bf16.mxu0 0
    %2572 = vmatmul.mubr.bf16.gmra.mrb[0].mxu0 %v2336
    %v2573 = vpop.f32.mrb[0].mxu0
    %v2574 = vadd.f32 0.0, %v2573
    %v2575 = vpop.f32.mrb[0].mxu0
    %v2576 = vadd.f32 0.0, %v2575
    %v2577 = vpop.f32.mrb[0].mxu0
    %v2578 = vpop.f32.mrb[0].mxu0
    %2579 = vdwg.mxu0
    %v2584 = vrot.slane %v2533, 2
    %v2585 = vrot.slane %v2535, 2
    %v2586 = vrot.slane %v2574, 2
    %v2587 = vrot.slane %v2576, 2
    %v2592 = vadd.f32 %v340, %v2584
    %v2593 = vadd.f32 %v342, %v2585
    %v2594 = vadd.f32 %v381, %v2586
    %v2595 = vadd.f32 %v383, %v2587
    %v2596 = vxor.u32 %v2592, 2147483648
    %v2597 = vxor.u32 %v2593, 2147483648
    %v2598 = vxor.u32 %v2594, 2147483648
    %v2599 = vmul.f32 %v2596, 1.442695
    %v2600 = vpow.pop %v2599
    %v2601 = vmul.f32 %v2597, 1.442695
    %v2602 = vpow.pop %v2601
    %v2603 = vmul.f32 %v2598, 1.442695
    %v2604 = vpow.pop %v2603
    %v2605 = vadd.f32 %v2600, 1.0
    %v2606 = vadd.f32 %v2602, 1.0
    %v2607 = vadd.f32 %v2604, 1.0
    %v2608 = vrcp.pop %v2605
    %v2609 = vmul.f32 1.0, %v2608
    %v2610 = vrcp.pop %v2606
    %v2611 = vmul.f32 1.0, %v2610
    %v2612 = vrcp.pop %v2607
    %v2613 = vmul.f32 1.0, %v2612
    %v2614 = vtanh.pop %v2595
    %v2616 = vrot.slane %v2296, 7
    %v2618 = vmul.f32 %v2611, %v2616
    %v2619 = vmul.f32 %v2609, %v2614
    %v2620 = vadd.f32 %v2618, %v2619
    %v2621 = vtanh.pop %v2620
    %v2622 = vmul.f32 %v2613, %v2621
    %2623 = vst [vmem:[#allocation2] sm:$0x40] %v2622
    %v2624 = vpack.c.bf16 %v2622, %v2622
    %v2625 = vld [vmem:[%s3] sm:$0xff]
    %v2626 = vld [vmem:[%s3 + $0x8] sm:$0xff]
    %v2627 = vld [vmem:[%s3 + $0x10] sm:$0xff]
    %v2628 = vld [vmem:[%s3 + $0x18] sm:$0xff]
    %v2629 = vld [vmem:[%s3 + $0x20] sm:$0xff]
    %v2630 = vld [vmem:[%s3 + $0x28] sm:$0xff]
    %v2631 = vld [vmem:[%s3 + $0x30] sm:$0xff]
    %v2632 = vld [vmem:[%s3 + $0x38] sm:$0xff]
    %v2633 = vld [vmem:[%s3 + $0x40] sm:$0xff]
    %v2634 = vld [vmem:[%s3 + $0x48] sm:$0xff]
    %v2635 = vld [vmem:[%s3 + $0x50] sm:$0xff]
    %v2636 = vld [vmem:[%s3 + $0x58] sm:$0xff]
    %v2637 = vld [vmem:[%s3 + $0x60] sm:$0xff]
    %v2638 = vld [vmem:[%s3 + $0x68] sm:$0xff]
    %v2639 = vld [vmem:[%s3 + $0x70] sm:$0xff]
    %v2640 = vld [vmem:[%s3 + $0x78] sm:$0xff]
    %v2641 = vld [vmem:[%s3 + $0x80] sm:$0xff]
    %v2642 = vld [vmem:[%s3 + $0x88] sm:$0xff]
    %v2643 = vld [vmem:[%s3 + $0x90] sm:$0xff]
    %v2644 = vld [vmem:[%s3 + $0x98] sm:$0xff]
    %v2645 = vld [vmem:[%s3 + $0xa0] sm:$0xff]
    %v2646 = vld [vmem:[%s3 + $0xa8] sm:$0xff]
    %v2647 = vld [vmem:[%s3 + $0xb0] sm:$0xff]
    %v2648 = vld [vmem:[%s3 + $0xb8] sm:$0xff]
    %v2649 = vld [vmem:[%s3 + $0xc0] sm:$0xff]
    %v2650 = vld [vmem:[%s3 + $0xc8] sm:$0xff]
    %v2651 = vld [vmem:[%s3 + $0xd0] sm:$0xff]
    %v2652 = vld [vmem:[%s3 + $0xd8] sm:$0xff]
    %v2653 = vld [vmem:[%s3 + $0xe0] sm:$0xff]
    %v2654 = vld [vmem:[%s3 + $0xe8] sm:$0xff]
    %v2655 = vld [vmem:[%s3 + $0xf0] sm:$0xff]
    %v2656 = vld [vmem:[%s3 + $0xf8] sm:$0xff]
    %v2658 = vrot.slane %v2624, 3
    %v2692 = vunpack.c.l.b16 %v2625
    %v2693 = vunpack.c.h.b16 %v2625
    %v2694 = vunpack.c.l.b16 %v2626
    %v2695 = vunpack.c.h.b16 %v2626
    %v2696 = vunpack.c.l.b16 %v2627
    %v2697 = vunpack.c.h.b16 %v2627
    %v2698 = vunpack.c.l.b16 %v2628
    %v2699 = vunpack.c.h.b16 %v2628
    %v2700 = vunpack.c.l.b16 %v2629
    %v2701 = vunpack.c.h.b16 %v2629
    %v2702 = vunpack.c.l.b16 %v2630
    %v2703 = vunpack.c.h.b16 %v2630
    %v2704 = vunpack.c.l.b16 %v2631
    %v2705 = vunpack.c.h.b16 %v2631
    %v2706 = vunpack.c.l.b16 %v2632
    %v2707 = vunpack.c.h.b16 %v2632
    %v2708 = vunpack.c.l.b16 %v2633
    %v2709 = vunpack.c.h.b16 %v2633
    %v2710 = vunpack.c.l.b16 %v2634
    %v2711 = vunpack.c.h.b16 %v2634
    %v2712 = vunpack.c.l.b16 %v2635
    %v2713 = vunpack.c.h.b16 %v2635
    %v2714 = vunpack.c.l.b16 %v2636
    %v2715 = vunpack.c.h.b16 %v2636
    %v2716 = vunpack.c.l.b16 %v2637
    %v2717 = vunpack.c.h.b16 %v2637
    %v2718 = vunpack.c.l.b16 %v2638
    %v2719 = vunpack.c.h.b16 %v2638
    %v2720 = vunpack.c.l.b16 %v2639
    %v2721 = vunpack.c.h.b16 %v2639
    %v2722 = vunpack.c.l.b16 %v2640
    %v2723 = vunpack.c.h.b16 %v2640
    %v2724 = vunpack.c.l.b16 %v2641
    %v2725 = vunpack.c.h.b16 %v2641
    %v2726 = vunpack.c.l.b16 %v2642
    %v2727 = vunpack.c.h.b16 %v2642
    %v2728 = vunpack.c.l.b16 %v2643
    %v2729 = vunpack.c.h.b16 %v2643
    %v2730 = vunpack.c.l.b16 %v2644
    %v2731 = vunpack.c.h.b16 %v2644
    %v2732 = vunpack.c.l.b16 %v2645
    %v2733 = vunpack.c.h.b16 %v2645
    %v2734 = vunpack.c.l.b16 %v2646
    %v2735 = vunpack.c.h.b16 %v2646
    %v2736 = vunpack.c.l.b16 %v2647
    %v2737 = vunpack.c.h.b16 %v2647
    %v2738 = vunpack.c.l.b16 %v2648
    %v2739 = vunpack.c.h.b16 %v2648
    %v2740 = vunpack.c.l.b16 %v2649
    %v2741 = vunpack.c.h.b16 %v2649
    %v2742 = vunpack.c.l.b16 %v2650
    %v2743 = vunpack.c.h.b16 %v2650
    %v2744 = vunpack.c.l.b16 %v2651
    %v2745 = vunpack.c.h.b16 %v2651
    %v2746 = vunpack.c.l.b16 %v2652
    %v2747 = vunpack.c.h.b16 %v2652
    %v2748 = vunpack.c.l.b16 %v2653
    %v2749 = vunpack.c.h.b16 %v2653
    %v2750 = vunpack.c.l.b16 %v2654
    %v2751 = vunpack.c.h.b16 %v2654
    %v2752 = vunpack.c.l.b16 %v2655
    %v2753 = vunpack.c.h.b16 %v2655
    %v2754 = vunpack.c.l.b16 %v2656
    %v2755 = vunpack.c.h.b16 %v2656
    %v2756 = vpack.c.b16 %v2696, %v2692
    %v2757 = vpack.c.b16 %v2697, %v2693
    %v2758 = vpack.c.b16 %v2698, %v2694
    %v2759 = vpack.c.b16 %v2699, %v2695
    %v2760 = vpack.c.b16 %v2704, %v2700
    %v2761 = vpack.c.b16 %v2705, %v2701
    %v2762 = vpack.c.b16 %v2706, %v2702
    %v2763 = vpack.c.b16 %v2707, %v2703
    %v2764 = vpack.c.b16 %v2712, %v2708
    %v2765 = vpack.c.b16 %v2713, %v2709
    %v2766 = vpack.c.b16 %v2714, %v2710
    %v2767 = vpack.c.b16 %v2715, %v2711
    %v2768 = vpack.c.b16 %v2720, %v2716
    %v2769 = vpack.c.b16 %v2721, %v2717
    %v2770 = vpack.c.b16 %v2722, %v2718
    %v2771 = vpack.c.b16 %v2723, %v2719
    %v2772 = vpack.c.b16 %v2728, %v2724
    %v2773 = vpack.c.b16 %v2729, %v2725
    %v2774 = vpack.c.b16 %v2730, %v2726
    %v2775 = vpack.c.b16 %v2731, %v2727
    %v2776 = vpack.c.b16 %v2736, %v2732
    %v2777 = vpack.c.b16 %v2737, %v2733
    %v2778 = vpack.c.b16 %v2738, %v2734
    %v2779 = vpack.c.b16 %v2739, %v2735
    %v2780 = vpack.c.b16 %v2744, %v2740
    %v2781 = vpack.c.b16 %v2745, %v2741
    %v2782 = vpack.c.b16 %v2746, %v2742
    %v2783 = vpack.c.b16 %v2747, %v2743
    %v2784 = vpack.c.b16 %v2752, %v2748
    %v2785 = vpack.c.b16 %v2753, %v2749
    %v2786 = vpack.c.b16 %v2754, %v2750
    %v2787 = vpack.c.b16 %v2755, %v2751
    %2820 = vmatprep.subr.bf16.mxu0 %v2757
    %2821 = vmatpush1.bf16.msra.mxu0 %v2756
    %2822 = vmatprep.subr.bf16.mxu0 %v2761
    %2823 = vmatpush1.bf16.msra.mxu0 %v2760
    %2824 = vmatprep.subr.bf16.mxu0 %v2765
    %2825 = vmatpush1.bf16.msra.mxu0 %v2764
    %2826 = vmatprep.subr.bf16.mxu0 %v2769
    %2827 = vmatpush1.bf16.msra.mxu0 %v2768
    %2828 = vmatprep.subr.bf16.mxu0 %v2773
    %2829 = vmatpush1.bf16.msra.mxu0 %v2772
    %2830 = vmatprep.subr.bf16.mxu0 %v2777
    %2831 = vmatpush1.bf16.msra.mxu0 %v2776
    %2832 = vmatprep.subr.bf16.mxu0 %v2781
    %2833 = vmatpush1.bf16.msra.mxu0 %v2780
    %2834 = vmatprep.subr.bf16.mxu0 %v2785
    %2835 = vmatpush1.bf16.msra.mxu0 %v2784
    %2836 = vmatprep.subr.bf16.mxu0 0
    %2837 = vmatpush1.bf16.msra.mxu0 0
    %2838 = vmatprep.subr.bf16.mxu0 0
    %2839 = vmatpush1.bf16.msra.mxu0 0
    %2840 = vmatprep.subr.bf16.mxu0 0
    %2841 = vmatpush1.bf16.msra.mxu0 0
    %2842 = vmatprep.subr.bf16.mxu0 0
    %2843 = vmatpush1.bf16.msra.mxu0 0
    %2844 = vmatprep.subr.bf16.mxu0 0
    %2845 = vmatpush1.bf16.msra.mxu0 0
    %2846 = vmatprep.subr.bf16.mxu0 0
    %2847 = vmatpush1.bf16.msra.mxu0 0
    %2848 = vmatprep.subr.bf16.mxu0 0
    %2849 = vmatpush1.bf16.msra.mxu0 0
    %2850 = vmatprep.subr.bf16.mxu0 0
    %2851 = vmatpush1.bf16.msra.mxu0 0
    %2852 = vmatprep.mubr.bf16.mxu0 0
    %2853 = vmatmul.mubr.bf16.gmra.mrb[0].mxu0 %v2658
    %v2854 = vpop.f32.mrb[0].mxu0
    %v2855 = vadd.f32 0.0, %v2854
    %v2856 = vpop.f32.mrb[0].mxu0
    %v2857 = vadd.f32 0.0, %v2856
    %v2858 = vpop.f32.mrb[0].mxu0
    %v2859 = vpop.f32.mrb[0].mxu0
    %2860 = vdwg.mxu0
    %2861 = vmatprep.subr.bf16.mxu0 %v2759
    %2862 = vmatpush1.bf16.msra.mxu0 %v2758
    %2863 = vmatprep.subr.bf16.mxu0 %v2763
    %2864 = vmatpush1.bf16.msra.mxu0 %v2762
    %2865 = vmatprep.subr.bf16.mxu0 %v2767
    %2866 = vmatpush1.bf16.msra.mxu0 %v2766
    %2867 = vmatprep.subr.bf16.mxu0 %v2771
    %2868 = vmatpush1.bf16.msra.mxu0 %v2770
    %2869 = vmatprep.subr.bf16.mxu0 %v2775
    %2870 = vmatpush1.bf16.msra.mxu0 %v2774
    %2871 = vmatprep.subr.bf16.mxu0 %v2779
    %2872 = vmatpush1.bf16.msra.mxu0 %v2778
    %2873 = vmatprep.subr.bf16.mxu0 %v2783
    %2874 = vmatpush1.bf16.msra.mxu0 %v2782
    %2875 = vmatprep.subr.bf16.mxu0 %v2787
    %2876 = vmatpush1.bf16.msra.mxu0 %v2786
    %2877 = vmatprep.subr.bf16.mxu0 0
    %2878 = vmatpush1.bf16.msra.mxu0 0
    %2879 = vmatprep.subr.bf16.mxu0 0
    %2880 = vmatpush1.bf16.msra.mxu0 0
    %2881 = vmatprep.subr.bf16.mxu0 0
    %2882 = vmatpush1.bf16.msra.mxu0 0
    %2883 = vmatprep.subr.bf16.mxu0 0
    %2884 = vmatpush1.bf16.msra.mxu0 0
    %2885 = vmatprep.subr.bf16.mxu0 0
    %2886 = vmatpush1.bf16.msra.mxu0 0
    %2887 = vmatprep.subr.bf16.mxu0 0
    %2888 = vmatpush1.bf16.msra.mxu0 0
    %2889 = vmatprep.subr.bf16.mxu0 0
    %2890 = vmatpush1.bf16.msra.mxu0 0
    %2891 = vmatprep.subr.bf16.mxu0 0
    %2892 = vmatpush1.bf16.msra.mxu0 0
    %2893 = vmatprep.mubr.bf16.mxu0 0
    %2894 = vmatmul.mubr.bf16.gmra.mrb[0].mxu0 %v2658
    %v2895 = vpop.f32.mrb[0].mxu0
    %v2896 = vadd.f32 0.0, %v2895
    %v2897 = vpop.f32.mrb[0].mxu0
    %v2898 = vadd.f32 0.0, %v2897
    %v2899 = vpop.f32.mrb[0].mxu0
    %v2900 = vpop.f32.mrb[0].mxu0
    %2901 = vdwg.mxu0
    %v2906 = vrot.slane %v2855, 1
    %v2907 = vrot.slane %v2857, 1
    %v2908 = vrot.slane %v2896, 1
    %v2909 = vrot.slane %v2898, 1
    %v2914 = vadd.f32 %v340, %v2906
    %v2915 = vadd.f32 %v342, %v2907
    %v2916 = vadd.f32 %v381, %v2908
    %v2917 = vadd.f32 %v383, %v2909
    %v2918 = vxor.u32 %v2914, 2147483648
    %v2919 = vxor.u32 %v2915, 2147483648
    %v2920 = vxor.u32 %v2916, 2147483648
    %v2921 = vmul.f32 %v2918, 1.442695
    %v2922 = vpow.pop %v2921
    %v2923 = vmul.f32 %v2919, 1.442695
    %v2924 = vpow.pop %v2923
    %v2925 = vmul.f32 %v2920, 1.442695
    %v2926 = vpow.pop %v2925
    %v2927 = vadd.f32 %v2922, 1.0
    %v2928 = vadd.f32 %v2924, 1.0
    %v2929 = vadd.f32 %v2926, 1.0
    %v2930 = vrcp.pop %v2927
    %v2931 = vmul.f32 1.0, %v2930
    %v2932 = vrcp.pop %v2928
    %v2933 = vmul.f32 1.0, %v2932
    %v2934 = vrcp.pop %v2929
    %v2935 = vmul.f32 1.0, %v2934
    %v2936 = vtanh.pop %v2917
    %v2938 = vrot.slane %v2620, 7
    %v2940 = vmul.f32 %v2933, %v2938
    %v2941 = vmul.f32 %v2931, %v2936
    %v2942 = vadd.f32 %v2940, %v2941
    %v2943 = vtanh.pop %v2942
    %v2944 = vmul.f32 %v2935, %v2943
    %2945 = vst [vmem:[#allocation2] sm:$0x80] %v2944
    %v2946 = vld [vmem:[#allocation2] sm:$0xff]
    %v2947 = vpack.c.bf16 %v2946, %v2946
    %v2948 = vld [vmem:[%s5] sm:$0xf]
    %v2949 = vld [vmem:[%s5 + $0x4] sm:$0xf]
    %v2950 = vld [vmem:[%s5 + $0x8] sm:$0xf]
    %v2951 = vld [vmem:[%s5 + $0xc] sm:$0xf]
    %v2952 = vld [vmem:[%s5 + $0x10] sm:$0xf]
    %v2953 = vld [vmem:[%s5 + $0x14] sm:$0xf]
    %v2954 = vld [vmem:[%s5 + $0x18] sm:$0xf]
    %v2955 = vld [vmem:[%s5 + $0x1c] sm:$0xf]
    %v2956 = vld [vmem:[%s5 + $0x20] sm:$0xf]
    %v2957 = vld [vmem:[%s5 + $0x24] sm:$0xf]
    %v2958 = vld [vmem:[%s5 + $0x28] sm:$0xf]
    %v2959 = vld [vmem:[%s5 + $0x2c] sm:$0xf]
    %v2960 = vld [vmem:[%s5 + $0x30] sm:$0xf]
    %v2961 = vld [vmem:[%s5 + $0x34] sm:$0xf]
    %v2962 = vld [vmem:[%s5 + $0x38] sm:$0xf]
    %v2963 = vld [vmem:[%s5 + $0x3c] sm:$0xf]
    %v2964 = vld [vmem:[%s6] sm:$0x1]
    %v2966 = vlaneseq
    %v2967 = vshrl.u32 %v2966, 7
    %v2968 = vsub.s32 0, %v2967
    %v2969 = vrot.slane %v2964, %v2968
    %v2987 = vunpack.c.l.b16 %v2948
    %v2988 = vunpack.c.l.b16 %v2949
    %v2989 = vunpack.c.l.b16 %v2950
    %v2990 = vunpack.c.l.b16 %v2951
    %v2991 = vunpack.c.l.b16 %v2952
    %v2992 = vunpack.c.l.b16 %v2953
    %v2993 = vunpack.c.l.b16 %v2954
    %v2994 = vunpack.c.l.b16 %v2955
    %v2995 = vunpack.c.l.b16 %v2956
    %v2996 = vunpack.c.l.b16 %v2957
    %v2997 = vunpack.c.l.b16 %v2958
    %v2998 = vunpack.c.l.b16 %v2959
    %v2999 = vunpack.c.l.b16 %v2960
    %v3000 = vunpack.c.l.b16 %v2961
    %v3001 = vunpack.c.l.b16 %v2962
    %v3002 = vunpack.c.l.b16 %v2963
    %v3003 = vpack.c.b16 %v2988, %v2987
    %v3004 = vpack.c.b16 %v2990, %v2989
    %v3005 = vpack.c.b16 %v2992, %v2991
    %v3006 = vpack.c.b16 %v2994, %v2993
    %v3007 = vpack.c.b16 %v2996, %v2995
    %v3008 = vpack.c.b16 %v2998, %v2997
    %v3009 = vpack.c.b16 %v3000, %v2999
    %v3010 = vpack.c.b16 %v3002, %v3001
    %3019 = vmatprep.subr.bf16.mxu0 0
    %3020 = vmatpush1.bf16.msra.mxu0 %v3003
    %3021 = vmatprep.subr.bf16.mxu0 0
    %3022 = vmatpush1.bf16.msra.mxu0 %v3004
    %3023 = vmatprep.subr.bf16.mxu0 0
    %3024 = vmatpush1.bf16.msra.mxu0 %v3005
    %3025 = vmatprep.subr.bf16.mxu0 0
    %3026 = vmatpush1.bf16.msra.mxu0 %v3006
    %3027 = vmatprep.subr.bf16.mxu0 0
    %3028 = vmatpush1.bf16.msra.mxu0 %v3007
    %3029 = vmatprep.subr.bf16.mxu0 0
    %3030 = vmatpush1.bf16.msra.mxu0 %v3008
    %3031 = vmatprep.subr.bf16.mxu0 0
    %3032 = vmatpush1.bf16.msra.mxu0 %v3009
    %3033 = vmatprep.subr.bf16.mxu0 0
    %3034 = vmatpush1.bf16.msra.mxu0 %v3010
    %3035 = vmatprep.subr.bf16.mxu0 0
    %3036 = vmatpush1.bf16.msra.mxu0 0
    %3037 = vmatprep.subr.bf16.mxu0 0
    %3038 = vmatpush1.bf16.msra.mxu0 0
    %3039 = vmatprep.subr.bf16.mxu0 0
    %3040 = vmatpush1.bf16.msra.mxu0 0
    %3041 = vmatprep.subr.bf16.mxu0 0
    %3042 = vmatpush1.bf16.msra.mxu0 0
    %3043 = vmatprep.subr.bf16.mxu0 0
    %3044 = vmatpush1.bf16.msra.mxu0 0
    %3045 = vmatprep.subr.bf16.mxu0 0
    %3046 = vmatpush1.bf16.msra.mxu0 0
    %3047 = vmatprep.subr.bf16.mxu0 0
    %3048 = vmatpush1.bf16.msra.mxu0 0
    %3049 = vmatprep.subr.bf16.mxu0 0
    %3050 = vmatpush1.bf16.msra.mxu0 0
    %3051 = vmatprep.mubr.bf16.mxu0 0
    %3052 = vmatmul.mubr.bf16.gmra.mrb[0].mxu0 %v2947
    %v3053 = vpop.f32.mrb[0].mxu0
    %v3054 = vadd.f32 %v2969, %v3053
    %v3055 = vpop.f32.mrb[0].mxu0
    %v3056 = vpop.f32.mrb[0].mxu0
    %v3057 = vpop.f32.mrb[0].mxu0
    %3058 = vdwg.mxu0
    %3059 = vmax.xlane.f32.xlu0 %v3054
    %v3060 = vpop.xlane.xlu0 %3059
    %v3061 = vsub.f32 %v3054, %v3060
    %v3062 = vmul.f32 %v3061, 1.442695
    %v3063 = vpow.pop %v3062
    %3064 = vadd.xlane.f32.xlu0 %v3063
    %v3065 = vpop.xlane.xlu0 %3064
    %v3066 = vlog2.pop %v3065
    %v3067 = vmul.f32 %v3066, 0.6931472
    %v3068 = vsub.f32 %v3061, %v3067
    %3069 = vst [vmem:[#allocation3] sm:$0xff] %v3068
    // Predicated region
    $region30: #{lstm_tagger_forward.1} parent=1 // pred_check
      _
    $region31: #{lstm_tagger_forward.1} parent=1 // pred_check_branch
      %3071 = sbr.rel (0) target = $region33
    $region32: #{lstm_tagger_forward.1} parent=1 // pred_region
      %s3073 = ssub.s32 128, 128
      %3074 = vsyncadd [#allocation4], %s3073
      %s3076 = sshll.u32 [#allocation3], 4
      %s3077 = int_to_ptr.vmem [resolvable:$true] %s3076
      %3079 = dma.vmem_to_hbm [thread:$0]  %s3077, 128, %s7, [#allocation4]
    $region33: #{lstm_tagger_forward.1} parent=1 // pred_fallthru
      _
    // Predicated region
    $region34: #{lstm_tagger_forward.1} parent=1 // pred_check
      _
    $region35: #{lstm_tagger_forward.1} parent=1 // pred_check_branch
      %3081 = sbr.rel (0) target = $region37
    $region36: #{lstm_tagger_forward.1} parent=1 // pred_region
      %3082 = dma.done [#allocation4], 128
    $region37: #{lstm_tagger_forward.1} parent=1 // pred_fallthru
      _
    %3083 = vsyncpa [#allocation4], 1

</llo_original>
